<compile_context>
chip_gen: v7x
topology: tpu7x:2x2x1
jax: 0.10.0
libtpu: 0.0.40
codegen_flags: <defaults>
</compile_context>

<pallas_src>
import functools

import numpy as np
import jax
import jax.numpy as jnp
from jax import lax
from jax.experimental import pallas as pl
from jax.experimental.pallas import tpu as pltpu


def _vmem_limit_bytes():
    # ~75% of physical VMEM: 48 MiB on v7x (64 MiB/TC), 96 MiB on v5e/v6e (128 MiB).
    try:
        cap = int(pltpu.get_tpu_info().vmem_capacity_bytes)
        return int(min(cap * 3 // 4, 96 * 1024 * 1024))
    except Exception:
        return 48 * 1024 * 1024


def _round_up(x, m):
    return ((x + m - 1) // m) * m


# =====================================================================================
# Fused SCI + CCI + GRU-input projection + reconstruction error (one batch / grid step)
# =====================================================================================
def _interp_recon_kernel(v_ref, m_ref, t_ref, g_ref, c_ref, tgt_ref,
                         k_ref, cciT_ref, wih_ref, bih_ref,
                         gi_ref, err_ref, *, g_len):
    xv = v_ref[0]                                      # (S, T) values
    m = m_ref[0]                                       # (S, T) mask (0/1 float)
    d = t_ref[0]                                       # (S, T) time stamps
    g3 = g_ref[...]                                    # (1, 1, G_pad) interpolation grid
    alpha = k_ref[...][:, :, None]                     # (S, 1, 1) softplus(kernel)
    xv3 = xv[:, :, None]                               # (S, T, 1)

    # -------- SingleChannelInterp on the interpolation grid (prediction branch) -------
    logm = jnp.log(m + 1e-9)[:, :, None]               # (S, T, 1)  (matches torch eps)
    an = alpha * (d[:, :, None] - g3) ** 2             # (S, T, G_pad)

    l1 = logm - an                                     # smooth branch
    mx1 = jnp.max(l1, axis=1)                          # (S, G_pad)
    e1 = jnp.exp(l1 - mx1[:, None, :])
    s1 = jnp.sum(e1, axis=1)                           # (S, G_pad), always >= 1
    y = jnp.sum(e1 * xv3, axis=1) * pl.reciprocal(s1, approx=True)
    w = jnp.log(s1) + mx1                              # == logsumexp
    intensity = s1 * jnp.exp(mx1)                      # == exp(w), one fewer exp pass

    l2 = logm - 10.0 * an                              # transient branch
    mx2 = jnp.max(l2, axis=1)
    e2 = jnp.exp(l2 - mx2[:, None, :])
    y_trans = (jnp.sum(e2 * xv3, axis=1)
               * pl.reciprocal(jnp.sum(e2, axis=1), approx=True))

    # -------- CrossChannelInterp, (S, G)-major (no (L, S) transposes) -----------------
    dmx = jnp.max(w, axis=0, keepdims=True)            # (1, G_pad)
    ew = s1 * jnp.exp(mx1 - dmx)                       # == exp(w - dmx)
    wsm = ew * pl.reciprocal(jnp.sum(ew, axis=0, keepdims=True), approx=True)
    # grid mean over REAL grid columns only (G padded to 128-multiple).
    col_valid = lax.broadcasted_iota(jnp.int32, (1, y.shape[-1]), 1) < g_len
    mean = jnp.sum(jnp.where(col_valid, y, 0.0), axis=1, keepdims=True) * (1.0 / g_len)
    rep1 = jnp.dot(cciT_ref[...], wsm * (y - mean),
                   preferred_element_type=jnp.float32) + mean          # (S, G_pad)
    ytr = y_trans - rep1

    # -------- single MXU contraction for the GRU input projection ---------------------
    X = jnp.concatenate([rep1, intensity, ytr], axis=0)                # (3S, G_pad)
    gi = jnp.dot(jnp.transpose(X), wih_ref[...],
                 preferred_element_type=jnp.float32) + bih_ref[...]    # (G_pad, 3H_pad)
    gi_ref[0] = gi                                                     # dense, unmasked store

    # -------- reconstruction branch (shares xv / d / alpha) ---------------------------
    c = c_ref[0]                                        # (S, T) context mask
    logc = jnp.log(c + 1e-9)[:, :, None]
    anr = alpha * (d[:, :, None] - d[:, None, :]) ** 2  # (S, T, T)
    lr = logc - anr
    mxr = jnp.max(lr, axis=1)
    er = jnp.exp(lr - mxr[:, None, :])
    sr = jnp.sum(er, axis=1)                            # (S, T)
    yr = jnp.sum(er * xv3, axis=1) * pl.reciprocal(sr, approx=True)
    wr = jnp.log(sr) + mxr
    dmxr = jnp.max(wr, axis=0, keepdims=True)
    ewr = sr * jnp.exp(mxr - dmxr)
    wsmr = ewr * pl.reciprocal(jnp.sum(ewr, axis=0, keepdims=True), approx=True)
    meanr = jnp.mean(yr, axis=1, keepdims=True)
    rep = jnp.dot(cciT_ref[...], wsmr * (yr - meanr),
                  preferred_element_type=jnp.float32) + meanr          # (S, T)

    tgt = tgt_ref[0]
    se = tgt * (xv - rep) ** 2
    num = jnp.sum(se, axis=(0, 1), keepdims=True)       # (1, 1)
    den = jnp.sum(tgt, axis=(0, 1), keepdims=True) + 1e-9
    err_ref[0] = num / den


def fused_interp_recon(values, mask_f, times, grid3, ctx_f, tgt_f,
                       pos_kernel, cci_T, wih_pad, bih_pad, g_len):
    Bp, S, T = values.shape
    Gp = grid3.shape[-1]
    H3p = wih_pad.shape[-1]
    kern = functools.partial(_interp_recon_kernel, g_len=g_len)
    return pl.pallas_call(
        kern,
        out_shape=(jax.ShapeDtypeStruct((Bp, Gp, H3p), jnp.float32),
                   jax.ShapeDtypeStruct((Bp, 1, 1), jnp.float32)),
        grid=(Bp,),
        in_specs=[
            pl.BlockSpec((1, S, T), lambda b: (b, 0, 0)),        # values
            pl.BlockSpec((1, S, T), lambda b: (b, 0, 0)),        # measurement mask
            pl.BlockSpec((1, S, T), lambda b: (b, 0, 0)),        # times
            pl.BlockSpec((1, 1, Gp), lambda b: (b, 0, 0)),       # interpolation grid
            pl.BlockSpec((1, S, T), lambda b: (b, 0, 0)),        # context mask
            pl.BlockSpec((1, S, T), lambda b: (b, 0, 0)),        # target mask
            pl.BlockSpec((S, 1), lambda b: (0, 0)),              # softplus(kernel)
            pl.BlockSpec((S, S), lambda b: (0, 0)),              # cci^T
            pl.BlockSpec(wih_pad.shape, lambda b: (0, 0)),       # (3S, 3H_pad)
            pl.BlockSpec((1, H3p), lambda b: (0, 0)),            # b_ih padded
        ],
        out_specs=(pl.BlockSpec((1, Gp, H3p), lambda b: (b, 0, 0)),
                   pl.BlockSpec((1, 1, 1), lambda b: (b, 0, 0))),
        compiler_params=pltpu.CompilerParams(
            dimension_semantics=("parallel",),
            vmem_limit_bytes=_vmem_limit_bytes()),
    )(values, mask_f, times, grid3, ctx_f, tgt_f, pos_kernel, cci_T, wih_pad, bih_pad)


# =====================================================================================
# Fused demo-encoder + GRU recurrence + output head.
# One grid step per 8-row batch tile ('parallel' -> splits across TCs on v7x);
# whole gi block resident in VMEM, fori_loop over 8-timestep chunks, only the final
# ('hidden'-pooled) state is projected and stored.
# =====================================================================================
def _gru_head_kernel(gi_ref, static_ref, dw1_ref, db1_ref, dw2_ref, db2_ref,
                     whh_ref, bhh_ref, ow_ref, ob_ref, out_ref,
                     *, hidden, kt, seq_len, n_chunks):
    H = hidden
    # demo encoder -> initial hidden state (eval mode: no dropout)
    h0 = jnp.maximum(
        jnp.dot(static_ref[...], dw1_ref[...], preferred_element_type=jnp.float32)
        + db1_ref[...], 0.0)
    h0 = jnp.dot(h0, dw2_ref[...], preferred_element_type=jnp.float32) + db2_ref[...]

    whh = whh_ref[...]            # (H, 3H_pad), zero-padded columns
    bhh = bhh_ref[...]            # (1, 3H_pad)

    def chunk_body(c, h):
        start = pl.multiple_of(c * kt, kt)
        chunk = gi_ref[:, pl.ds(start, kt), :]         # (Bt, kt, 3H_pad), VMEM-resident
        for i in range(kt):                            # static unroll within the chunk
            gi = chunk[:, i, :]                        # (Bt, 3H_pad) precomputed x@W_ih+b_ih
            gh = jnp.dot(h, whh, preferred_element_type=jnp.float32) + bhh
            rz = jax.nn.sigmoid(gi[:, :2 * H] + gh[:, :2 * H])
            r = rz[:, :H]
            z = rz[:, H:2 * H]
            n = jnp.tanh(gi[:, 2 * H:3 * H] + r * gh[:, 2 * H:3 * H])
            h_new = (1.0 - z) * n + z * h
            valid = (c * kt + i) < seq_len             # mask padded grid timesteps
            h = jnp.where(valid, h_new, h)
        return h

    h = lax.fori_loop(0, n_chunks, chunk_body, h0)
    # fused output head on the final hidden state ('hidden' pooling)
    out_ref[...] = (jnp.dot(h, ow_ref[...], preferred_element_type=jnp.float32)
                    + ob_ref[...])


def gru_head(gi, static_p, dw1, db1, dw2, db2, whh, bhh, ow, ob, *, seq_len, kt=8):
    Bp, Gp, H3p = gi.shape
    H = whh.shape[0]
    Op = ow.shape[-1]
    Ds = static_p.shape[-1]
    BT = 8
    n_chunks = -(-seq_len // kt)
    kern = functools.partial(_gru_head_kernel, hidden=H, kt=kt,
                             seq_len=seq_len, n_chunks=n_chunks)
    return pl.pallas_call(
        kern,
        out_shape=jax.ShapeDtypeStruct((Bp, Op), jnp.float32),
        grid=(Bp // BT,),
        in_specs=[
            pl.BlockSpec((BT, Gp, H3p), lambda bt: (bt, 0, 0)),
            pl.BlockSpec((BT, Ds), lambda bt: (bt, 0)),
            pl.BlockSpec(dw1.shape, lambda bt: (0, 0)),
            pl.BlockSpec(db1.shape, lambda bt: (0, 0)),
            pl.BlockSpec(dw2.shape, lambda bt: (0, 0)),
            pl.BlockSpec(db2.shape, lambda bt: (0, 0)),
            pl.BlockSpec(whh.shape, lambda bt: (0, 0)),
            pl.BlockSpec(bhh.shape, lambda bt: (0, 0)),
            pl.BlockSpec(ow.shape, lambda bt: (0, 0)),
            pl.BlockSpec(ob.shape, lambda bt: (0, 0)),
        ],
        out_specs=pl.BlockSpec((BT, Op), lambda bt: (bt, 0)),
        compiler_params=pltpu.CompilerParams(
            dimension_semantics=("parallel",),
            vmem_limit_bytes=_vmem_limit_bytes()),
    )(gi, static_p, dw1, db1, dw2, db2, whh, bhh, ow, ob)


# =====================================================================================
# Timepoint grid construction (host glue: dynamic-shape nonzero / index_put)
# =====================================================================================
def create_timepoint_grid_np(x, static, time, sensor_mask, stepsize):
    x = np.asarray(x, np.float32)
    time = np.asarray(time, np.float32)
    sensor_mask = np.asarray(sensor_mask).astype(bool)
    B = x.shape[0]
    end_time = float(np.max(time))
    all_x, all_y, all_m, all_grid, all_gl = [], [], [], [], []
    for b in range(B):
        y_ind = x[b].T.copy()                        # (T, S)
        x_ind = time[b]                              # (T,)
        smask = sensor_mask[b].T.copy()              # (T, S)
        length = np.nonzero(smask.sum(axis=0))[0].reshape(-1, 1)   # like torch.nonzero
        X = x_ind[:, None]                           # (T, 1)
        n_observed = (smask == False).sum(axis=0)    # noqa: E712
        eq = (n_observed[None, :] == length)         # (n, S) broadcast, as in torch
        noe = np.where(eq)[0]
        zer = np.zeros_like(noe)
        y_ind[zer, noe] = 0.0                        # index_put fixup
        smask[zer, noe] = True
        grid = np.arange(0.0, end_time + stepsize, stepsize, dtype=np.float32)
        all_gl.append(np.int32(grid.shape[0]))
        X = np.tile(X, (1, y_ind.shape[-1])).T       # (S, T)
        all_x.append(X.astype(np.float32))
        all_y.append(y_ind.T.astype(np.float32))     # (S, T)
        all_m.append(smask.T)                        # (S, T)
        all_grid.append(grid)
    return (np.stack(all_x), np.stack(all_y), np.stack(all_m),
            np.stack(all_grid), np.stack(all_gl), np.asarray(static, np.float32))


# =====================================================================================
# Full model forward
# =====================================================================================
def ipnet_forward(params, x, static, time, sensor_mask, rng_key,
                  stepsize=1.0, reconst_fraction=0.25):
    (times_np, values_np, meas_np, grid_np, gl_np,
     static_np) = create_timepoint_grid_np(x, static, time, sensor_mask, stepsize)
    # grid_lengths are all equal (global end_time), so 'hidden' pooling == final hidden.
    assert int(gl_np.min()) == int(gl_np.max()) == grid_np.shape[-1]

    B, S, T = values_np.shape
    G = grid_np.shape[-1]
    H = params["w_hh"].shape[0]
    O = params["out_w"].shape[-1]

    BT = 8
    B_pad = max(BT, _round_up(B, BT))        # sublane-dense (B, H) recurrence blocks
    G_pad = _round_up(G, 128)                # lane-dense interpolation / gi tiles
    H3 = 3 * H
    H3_pad = _round_up(H3, 128)              # lane-dense gi columns
    O_pad = _round_up(O, 128)                # lane-dense logits store

    def pad_batch(a):
        pads = [(0, B_pad - B)] + [(0, 0)] * (a.ndim - 1)
        return jnp.pad(a, pads)

    values = pad_batch(jnp.asarray(values_np))
    times = pad_batch(jnp.asarray(times_np))
    meas_b = pad_batch(jnp.asarray(meas_np))                 # bool (B_pad, S, T)
    mask_f = meas_b.astype(jnp.float32)
    grid = jnp.pad(jnp.asarray(grid_np), ((0, B_pad - B), (0, G_pad - G)))
    grid3 = grid.reshape(B_pad, 1, G_pad)
    static_p = pad_batch(jnp.asarray(static_np))

    # Reconstruction context / target masks (computed in eval mode too, as in torch).
    reconst_mask = jax.random.uniform(rng_key, meas_b.shape) > reconst_fraction
    context = meas_b & reconst_mask
    nothing_observed = jnp.sum(context, axis=-1, keepdims=True) == 0
    context = context | nothing_observed
    target = (meas_b & (~context)).astype(jnp.float32)
    ctx_f = context.astype(jnp.float32)

    # Parameter prep (done once, outside the kernels).
    pos_kernel = jnp.log1p(jnp.exp(params["sci_kernel"])).reshape(S, 1)   # softplus
    cci_T = jnp.transpose(params["cci"])
    wih_pad = jnp.pad(params["w_ih"], ((0, 0), (0, H3_pad - H3)))         # (3S, 3H_pad)
    bih_pad = jnp.pad(params["b_ih"], (0, H3_pad - H3)).reshape(1, H3_pad)
    whh_pad = jnp.pad(params["w_hh"], ((0, 0), (0, H3_pad - H3)))         # (H, 3H_pad)
    bhh_pad = jnp.pad(params["b_hh"], (0, H3_pad - H3)).reshape(1, H3_pad)
    ow_pad = jnp.pad(params["out_w"], ((0, 0), (0, O_pad - O)))           # (H, O_pad)
    ob_pad = jnp.pad(params["out_b"], (0, O_pad - O)).reshape(1, O_pad)
    db1 = params["demo_b1"].reshape(1, -1)
    db2 = params["demo_b2"].reshape(1, -1)

    # Fused interpolation + GRU-input projection + reconstruction error.
    gi, err = fused_interp_recon(values, mask_f, times, grid3, ctx_f, target,
                                 pos_kernel, cci_T, wih_pad, bih_pad, g_len=G)

    # Fused demo encoder + GRU recurrence + output head.
    logits = gru_head(gi, static_p, params["demo_w1"], db1, params["demo_w2"], db2,
                      whh_pad, bhh_pad, ow_pad, ob_pad, seq_len=G, kt=8)

    output = logits[:B, :O]
    instance_err = err[:B, 0, 0]
    # Eval-mode: dropout layers are identity, reconstruction_loss == 0 (as in torch eval).
    reconstruction_loss = jnp.zeros((), jnp.float32)
    return output, reconstruction_loss, instance_err


def init_params(key, sensor_count, recurrent_n_units, output_dims, static_dim):
    S, H = sensor_count, recurrent_n_units
    F = 3 * S
    ks = jax.random.split(key, 8)
    sc = 0.1
    return {
        "sci_kernel": jnp.zeros((S,), jnp.float32),            # SingleChannelInterp.kernel
        "cci": jnp.eye(S, dtype=jnp.float32),                  # CrossChannelInterp param
        "demo_w1": sc * jax.random.normal(ks[0], (static_dim, H), jnp.float32),
        "demo_b1": jnp.zeros((H,), jnp.float32),
        "demo_w2": sc * jax.random.normal(ks[1], (H, H), jnp.float32),
        "demo_b2": jnp.zeros((H,), jnp.float32),
        "w_ih": sc * jax.random.normal(ks[2], (F, 3 * H), jnp.float32),   # [r|z|n] columns
        "w_hh": sc * jax.random.normal(ks[3], (H, 3 * H), jnp.float32),
        "b_ih": jnp.zeros((3 * H,), jnp.float32),
        "b_hh": jnp.zeros((3 * H,), jnp.float32),
        "out_w": sc * jax.random.normal(ks[4], (H, output_dims), jnp.float32),
        "out_b": jnp.zeros((output_dims,), jnp.float32),
    }


if __name__ == "__main__":
    B, S, T = 2, 4, 8            # batch, sensor_count, raw time steps
    H, output_dims, d_static = 32, 3, 6
    stepsize, reconst_fraction = 1.0, 0.25

    root = jax.random.PRNGKey(0)
    k_param, k_x, k_t, k_m, k_s, k_r = jax.random.split(root, 6)

    params = init_params(k_param, S, H, output_dims, d_static)

    x = jax.random.normal(k_x, (B, S, T), jnp.float32)
    time = jnp.sort(jax.random.uniform(k_t, (B, T), jnp.float32) * 8.0, axis=1)
    sensor_mask = jax.random.uniform(k_m, (B, S, T)) < 0.7
    static = jax.random.normal(k_s, (B, d_static), jnp.float32)

    out, recon_loss, inst_err = ipnet_forward(
        params, x, static, time, sensor_mask, k_r,
        stepsize=stepsize, reconst_fraction=reconst_fraction)

    jax.block_until_ready((out, recon_loss, inst_err))
    assert out.shape == (B, output_dims)
    assert inst_err.shape == (B,)
    assert bool(jnp.all(jnp.isfinite(out)))
    print("KERNEL_OK")
</pallas_src>

<mosaic_0001>
module attributes {stable_mosaic.version = 11 : i64} {
  func.func @_interp_recon_kernel(%arg0: i32, %arg1: memref<1x4x8xf32, #tpu.memory_space<vmem>>, %arg2: memref<1x4x8xf32, #tpu.memory_space<vmem>>, %arg3: memref<1x4x8xf32, #tpu.memory_space<vmem>>, %arg4: memref<1x1x128xf32, #tpu.memory_space<vmem>>, %arg5: memref<1x4x8xf32, #tpu.memory_space<vmem>>, %arg6: memref<1x4x8xf32, #tpu.memory_space<vmem>>, %arg7: memref<4x1xf32, #tpu.memory_space<vmem>>, %arg8: memref<4x4xf32, #tpu.memory_space<vmem>>, %arg9: memref<12x128xf32, #tpu.memory_space<vmem>>, %arg10: memref<1x128xf32, #tpu.memory_space<vmem>>, %arg11: memref<1x128x128xf32, #tpu.memory_space<vmem>>, %arg12: memref<1x1x1xf32, #tpu.memory_space<vmem>>) attributes {dimension_semantics = [#tpu.dimension_semantics<parallel>], iteration_bounds = array<i64: 8>, scalar_prefetch = 0 : i64, scratch_operands = 0 : i64, tpu.core_type = #tpu.core_type<tc>, window_params = [{transform_indices = @transform_0, window_bounds = array<i64: 1, 4, 8>}, {transform_indices = @transform_1, window_bounds = array<i64: 1, 4, 8>}, {transform_indices = @transform_2, window_bounds = array<i64: 1, 4, 8>}, {transform_indices = @transform_3, window_bounds = array<i64: 1, 1, 128>}, {transform_indices = @transform_4, window_bounds = array<i64: 1, 4, 8>}, {transform_indices = @transform_5, window_bounds = array<i64: 1, 4, 8>}, {pipeline_mode = #tpu.pipeline_mode<synchronous>, transform_indices = @transform_6, window_bounds = array<i64: 4, 1>}, {pipeline_mode = #tpu.pipeline_mode<synchronous>, transform_indices = @transform_7, window_bounds = array<i64: 4, 4>}, {pipeline_mode = #tpu.pipeline_mode<synchronous>, transform_indices = @transform_8, window_bounds = array<i64: 12, 128>}, {pipeline_mode = #tpu.pipeline_mode<synchronous>, transform_indices = @transform_9, window_bounds = array<i64: 1, 128>}, {transform_indices = @transform_10, window_bounds = array<i64: 1, 128, 128>}, {transform_indices = @transform_11, window_bounds = array<i64: 1, 1, 1>}]} {
    %c0 = arith.constant 0 : index
    %c0_0 = arith.constant 0 : index
    %c0_1 = arith.constant 0 : index
    %0 = vector.load %arg1[%c0, %c0_0, %c0_1] : memref<1x4x8xf32, #tpu.memory_space<vmem>>, vector<1x4x8xf32>
    %1 = vector.shape_cast %0 : vector<1x4x8xf32> to vector<4x8xf32>
    %c0_2 = arith.constant 0 : index
    %c0_3 = arith.constant 0 : index
    %c0_4 = arith.constant 0 : index
    %2 = vector.load %arg2[%c0_2, %c0_3, %c0_4] : memref<1x4x8xf32, #tpu.memory_space<vmem>>, vector<1x4x8xf32>
    %3 = vector.shape_cast %2 : vector<1x4x8xf32> to vector<4x8xf32>
    %c0_5 = arith.constant 0 : index
    %c0_6 = arith.constant 0 : index
    %c0_7 = arith.constant 0 : index
    %4 = vector.load %arg3[%c0_5, %c0_6, %c0_7] : memref<1x4x8xf32, #tpu.memory_space<vmem>>, vector<1x4x8xf32>
    %5 = vector.shape_cast %4 : vector<1x4x8xf32> to vector<4x8xf32>
    %c0_8 = arith.constant 0 : index
    %c0_9 = arith.constant 0 : index
    %c0_10 = arith.constant 0 : index
    %6 = vector.load %arg4[%c0_8, %c0_9, %c0_10] : memref<1x1x128xf32, #tpu.memory_space<vmem>>, vector<1x1x128xf32>
    %c0_11 = arith.constant 0 : index
    %c0_12 = arith.constant 0 : index
    %7 = vector.load %arg7[%c0_11, %c0_12] : memref<4x1xf32, #tpu.memory_space<vmem>>, vector<4x1xf32>
    %8 = vector.shape_cast %7 : vector<4x1xf32> to vector<4x1x1xf32>
    %9 = vector.shape_cast %1 : vector<4x8xf32> to vector<4x8x1xf32>
    %cst = arith.constant 9.99999971E-10 : f32
    %10 = vector.broadcast %cst : f32 to vector<4x8xf32>
    %11 = arith.addf %3, %10 : vector<4x8xf32>
    %12 = math.log %11 : vector<4x8xf32>
    %13 = vector.shape_cast %12 : vector<4x8xf32> to vector<4x8x1xf32>
    %14 = vector.shape_cast %5 : vector<4x8xf32> to vector<4x8x1xf32>
    %15 = vector.broadcast %14 : vector<4x8x1xf32> to vector<4x8x128xf32>
    %16 = vector.broadcast %6 : vector<1x1x128xf32> to vector<4x8x128xf32>
    %17 = arith.subf %15, %16 : vector<4x8x128xf32>
    %18 = arith.mulf %17, %17 : vector<4x8x128xf32>
    %19 = vector.broadcast %8 : vector<4x1x1xf32> to vector<4x8x128xf32>
    %20 = arith.mulf %19, %18 : vector<4x8x128xf32>
    %21 = vector.broadcast %13 : vector<4x8x1xf32> to vector<4x8x128xf32>
    %22 = arith.subf %21, %20 : vector<4x8x128xf32>
    %cst_13 = arith.constant dense<0xFF800000> : vector<4x128xf32>
    %23 = vector.multi_reduction <maximumf>, %22, %cst_13 [1] : vector<4x8x128xf32> to vector<4x128xf32>
    %24 = vector.shape_cast %23 : vector<4x128xf32> to vector<4x1x128xf32>
    %25 = vector.broadcast %24 : vector<4x1x128xf32> to vector<4x8x128xf32>
    %26 = arith.subf %22, %25 : vector<4x8x128xf32>
    %27 = math.exp %26 : vector<4x8x128xf32>
    %cst_14 = arith.constant dense<0.000000e+00> : vector<4x128xf32>
    %28 = vector.multi_reduction <add>, %27, %cst_14 [1] : vector<4x8x128xf32> to vector<4x128xf32>
    %29 = vector.broadcast %9 : vector<4x8x1xf32> to vector<4x8x128xf32>
    %30 = arith.mulf %27, %29 : vector<4x8x128xf32>
    %cst_15 = arith.constant dense<0.000000e+00> : vector<4x128xf32>
    %31 = vector.multi_reduction <add>, %30, %cst_15 [1] : vector<4x8x128xf32> to vector<4x128xf32>
    %32 = tpu.reciprocal %28 {approx = true} : vector<4x128xf32> -> vector<4x128xf32>
    %33 = arith.mulf %31, %32 : vector<4x128xf32>
    %34 = math.log %28 : vector<4x128xf32>
    %35 = arith.addf %34, %23 : vector<4x128xf32>
    %36 = math.exp %23 : vector<4x128xf32>
    %37 = arith.mulf %28, %36 : vector<4x128xf32>
    %cst_16 = arith.constant 1.000000e+01 : f32
    %38 = vector.broadcast %cst_16 : f32 to vector<4x8x128xf32>
    %39 = arith.mulf %38, %20 : vector<4x8x128xf32>
    %40 = vector.broadcast %13 : vector<4x8x1xf32> to vector<4x8x128xf32>
    %41 = arith.subf %40, %39 : vector<4x8x128xf32>
    %cst_17 = arith.constant dense<0xFF800000> : vector<4x128xf32>
    %42 = vector.multi_reduction <maximumf>, %41, %cst_17 [1] : vector<4x8x128xf32> to vector<4x128xf32>
    %43 = vector.shape_cast %42 : vector<4x128xf32> to vector<4x1x128xf32>
    %44 = vector.broadcast %43 : vector<4x1x128xf32> to vector<4x8x128xf32>
    %45 = arith.subf %41, %44 : vector<4x8x128xf32>
    %46 = math.exp %45 : vector<4x8x128xf32>
    %47 = vector.broadcast %9 : vector<4x8x1xf32> to vector<4x8x128xf32>
    %48 = arith.mulf %46, %47 : vector<4x8x128xf32>
    %cst_18 = arith.constant dense<0.000000e+00> : vector<4x128xf32>
    %49 = vector.multi_reduction <add>, %48, %cst_18 [1] : vector<4x8x128xf32> to vector<4x128xf32>
    %cst_19 = arith.constant dense<0.000000e+00> : vector<4x128xf32>
    %50 = vector.multi_reduction <add>, %46, %cst_19 [1] : vector<4x8x128xf32> to vector<4x128xf32>
    %51 = tpu.reciprocal %50 {approx = true} : vector<4x128xf32> -> vector<4x128xf32>
    %52 = arith.mulf %49, %51 : vector<4x128xf32>
    %cst_20 = arith.constant dense<0xFF800000> : vector<128xf32>
    %53 = vector.multi_reduction <maximumf>, %35, %cst_20 [0] : vector<4x128xf32> to vector<128xf32>
    %54 = vector.shape_cast %53 : vector<128xf32> to vector<1x128xf32>
    %55 = vector.broadcast %54 : vector<1x128xf32> to vector<4x128xf32>
    %56 = arith.subf %23, %55 : vector<4x128xf32>
    %57 = math.exp %56 : vector<4x128xf32>
    %58 = arith.mulf %28, %57 : vector<4x128xf32>
    %cst_21 = arith.constant dense<0.000000e+00> : vector<128xf32>
    %59 = vector.multi_reduction <add>, %58, %cst_21 [0] : vector<4x128xf32> to vector<128xf32>
    %60 = vector.shape_cast %59 : vector<128xf32> to vector<1x128xf32>
    %61 = tpu.reciprocal %60 {approx = true} : vector<1x128xf32> -> vector<1x128xf32>
    %62 = vector.broadcast %61 : vector<1x128xf32> to vector<4x128xf32>
    %63 = arith.mulf %58, %62 : vector<4x128xf32>
    %64 = tpu.iota {dimensions = array<i32: 1>} : vector<1x128xi32>
    %c9_i32 = arith.constant 9 : i32
    %65 = vector.broadcast %c9_i32 : i32 to vector<1x128xi32>
    %66 = arith.cmpi slt, %64, %65 : vector<1x128xi32>
    %cst_22 = arith.constant 0.000000e+00 : f32
    %67 = vector.shape_cast %66 : vector<1x128xi1> to vector<1x128xi1>
    %68 = vector.broadcast %67 : vector<1x128xi1> to vector<4x128xi1>
    %69 = vector.broadcast %cst_22 : f32 to vector<4x128xf32>
    %70 = arith.select %68, %33, %69 : vector<4x128xi1>, vector<4x128xf32>
    %cst_23 = arith.constant dense<0.000000e+00> : vector<4xf32>
    %71 = vector.multi_reduction <add>, %70, %cst_23 [1] : vector<4x128xf32> to vector<4xf32>
    %72 = vector.shape_cast %71 : vector<4xf32> to vector<4x1xf32>
    %cst_24 = arith.constant 0.111111112 : f32
    %73 = vector.broadcast %cst_24 : f32 to vector<4x1xf32>
    %74 = arith.mulf %72, %73 : vector<4x1xf32>
    %c0_25 = arith.constant 0 : index
    %c0_26 = arith.constant 0 : index
    %75 = vector.load %arg8[%c0_25, %c0_26] : memref<4x4xf32, #tpu.memory_space<vmem>>, vector<4x4xf32>
    %76 = vector.broadcast %74 : vector<4x1xf32> to vector<4x128xf32>
    %77 = arith.subf %33, %76 : vector<4x128xf32>
    %78 = arith.mulf %63, %77 : vector<4x128xf32>
    %cst_27 = arith.constant dense<0.000000e+00> : vector<4x128xf32>
    %79 = tpu.matmul %75, %78, %cst_27 {dimension_numbers = #tpu.dot_dimension_numbers<[1], [0], [0], [1], [0, 0, 1, 1], [], []>} : vector<4x4xf32>, vector<4x128xf32>, vector<4x128xf32> -> vector<4x128xf32>
    %80 = vector.broadcast %74 : vector<4x1xf32> to vector<4x128xf32>
    %81 = arith.addf %79, %80 : vector<4x128xf32>
    %82 = arith.subf %52, %81 : vector<4x128xf32>
    %83 = tpu.concatenate %81, %37, %82 in 0 : vector<4x128xf32>, vector<4x128xf32>, vector<4x128xf32> -> vector<12x128xf32>
    %84 = tpu.transpose %83, [1, 0] : vector<12x128xf32> -> vector<128x12xf32>
    %c0_28 = arith.constant 0 : index
    %c0_29 = arith.constant 0 : index
    %85 = vector.load %arg9[%c0_28, %c0_29] : memref<12x128xf32, #tpu.memory_space<vmem>>, vector<12x128xf32>
    %cst_30 = arith.constant dense<0.000000e+00> : vector<128x128xf32>
    %86 = tpu.matmul %84, %85, %cst_30 {dimension_numbers = #tpu.dot_dimension_numbers<[1], [0], [0], [1], [0, 0, 1, 1], [], []>} : vector<128x12xf32>, vector<12x128xf32>, vector<128x128xf32> -> vector<128x128xf32>
    %c0_31 = arith.constant 0 : index
    %c0_32 = arith.constant 0 : index
    %87 = vector.load %arg10[%c0_31, %c0_32] : memref<1x128xf32, #tpu.memory_space<vmem>>, vector<1x128xf32>
    %88 = vector.broadcast %87 : vector<1x128xf32> to vector<128x128xf32>
    %89 = arith.addf %86, %88 : vector<128x128xf32>
    %c0_33 = arith.constant 0 : index
    %c0_34 = arith.constant 0 : index
    %c0_35 = arith.constant 0 : index
    %90 = vector.load %arg11[%c0_33, %c0_34, %c0_35] : memref<1x128x128xf32, #tpu.memory_space<vmem>>, vector<1x128x128xf32>
    %91 = vector.shape_cast %90 : vector<1x128x128xf32> to vector<128x128xf32>
    %92 = vector.shape_cast %89 : vector<128x128xf32> to vector<1x128x128xf32>
    tpu.vector_store %arg11[%c0_33, %c0_34, %c0_35], %92 {strides = array<i32>} : memref<1x128x128xf32, #tpu.memory_space<vmem>>, vector<1x128x128xf32>,
    %c0_36 = arith.constant 0 : index
    %c0_37 = arith.constant 0 : index
    %c0_38 = arith.constant 0 : index
    %93 = vector.load %arg5[%c0_36, %c0_37, %c0_38] : memref<1x4x8xf32, #tpu.memory_space<vmem>>, vector<1x4x8xf32>
    %94 = vector.shape_cast %93 : vector<1x4x8xf32> to vector<4x8xf32>
    %cst_39 = arith.constant 9.99999971E-10 : f32
    %95 = vector.broadcast %cst_39 : f32 to vector<4x8xf32>
    %96 = arith.addf %94, %95 : vector<4x8xf32>
    %97 = math.log %96 : vector<4x8xf32>
    %98 = vector.shape_cast %97 : vector<4x8xf32> to vector<4x8x1xf32>
    %99 = vector.shape_cast %5 : vector<4x8xf32> to vector<4x8x1xf32>
    %100 = vector.shape_cast %5 : vector<4x8xf32> to vector<4x1x8xf32>
    %101 = vector.broadcast %99 : vector<4x8x1xf32> to vector<4x8x8xf32>
    %102 = vector.broadcast %100 : vector<4x1x8xf32> to vector<4x8x8xf32>
    %103 = arith.subf %101, %102 : vector<4x8x8xf32>
    %104 = arith.mulf %103, %103 : vector<4x8x8xf32>
    %105 = vector.broadcast %8 : vector<4x1x1xf32> to vector<4x8x8xf32>
    %106 = arith.mulf %105, %104 : vector<4x8x8xf32>
    %107 = vector.broadcast %98 : vector<4x8x1xf32> to vector<4x8x8xf32>
    %108 = arith.subf %107, %106 : vector<4x8x8xf32>
    %cst_40 = arith.constant dense<0xFF800000> : vector<4x8xf32>
    %109 = vector.multi_reduction <maximumf>, %108, %cst_40 [1] : vector<4x8x8xf32> to vector<4x8xf32>
    %110 = vector.shape_cast %109 : vector<4x8xf32> to vector<4x1x8xf32>
    %111 = vector.broadcast %110 : vector<4x1x8xf32> to vector<4x8x8xf32>
    %112 = arith.subf %108, %111 : vector<4x8x8xf32>
    %113 = math.exp %112 : vector<4x8x8xf32>
    %cst_41 = arith.constant dense<0.000000e+00> : vector<4x8xf32>
    %114 = vector.multi_reduction <add>, %113, %cst_41 [1] : vector<4x8x8xf32> to vector<4x8xf32>
    %115 = vector.broadcast %9 : vector<4x8x1xf32> to vector<4x8x8xf32>
    %116 = arith.mulf %113, %115 : vector<4x8x8xf32>
    %cst_42 = arith.constant dense<0.000000e+00> : vector<4x8xf32>
    %117 = vector.multi_reduction <add>, %116, %cst_42 [1] : vector<4x8x8xf32> to vector<4x8xf32>
    %118 = tpu.reciprocal %114 {approx = true} : vector<4x8xf32> -> vector<4x8xf32>
    %119 = arith.mulf %117, %118 : vector<4x8xf32>
    %120 = math.log %114 : vector<4x8xf32>
    %121 = arith.addf %120, %109 : vector<4x8xf32>
    %cst_43 = arith.constant dense<0xFF800000> : vector<8xf32>
    %122 = vector.multi_reduction <maximumf>, %121, %cst_43 [0] : vector<4x8xf32> to vector<8xf32>
    %123 = vector.shape_cast %122 : vector<8xf32> to vector<1x8xf32>
    %124 = vector.broadcast %123 : vector<1x8xf32> to vector<4x8xf32>
    %125 = arith.subf %109, %124 : vector<4x8xf32>
    %126 = math.exp %125 : vector<4x8xf32>
    %127 = arith.mulf %114, %126 : vector<4x8xf32>
    %cst_44 = arith.constant dense<0.000000e+00> : vector<8xf32>
    %128 = vector.multi_reduction <add>, %127, %cst_44 [0] : vector<4x8xf32> to vector<8xf32>
    %129 = vector.shape_cast %128 : vector<8xf32> to vector<1x8xf32>
    %130 = tpu.reciprocal %129 {approx = true} : vector<1x8xf32> -> vector<1x8xf32>
    %131 = vector.broadcast %130 : vector<1x8xf32> to vector<4x8xf32>
    %132 = arith.mulf %127, %131 : vector<4x8xf32>
    %cst_45 = arith.constant dense<0.000000e+00> : vector<4xf32>
    %133 = vector.multi_reduction <add>, %119, %cst_45 [1] : vector<4x8xf32> to vector<4xf32>
    %134 = vector.shape_cast %133 : vector<4xf32> to vector<4x1xf32>
    %cst_46 = arith.constant 8.000000e+00 : f32
    %135 = vector.broadcast %cst_46 : f32 to vector<4x1xf32>
    %136 = arith.divf %134, %135 : vector<4x1xf32>
    %c0_47 = arith.constant 0 : index
    %c0_48 = arith.constant 0 : index
    %137 = vector.load %arg8[%c0_47, %c0_48] : memref<4x4xf32, #tpu.memory_space<vmem>>, vector<4x4xf32>
    %138 = vector.broadcast %136 : vector<4x1xf32> to vector<4x8xf32>
    %139 = arith.subf %119, %138 : vector<4x8xf32>
    %140 = arith.mulf %132, %139 : vector<4x8xf32>
    %cst_49 = arith.constant dense<0.000000e+00> : vector<4x8xf32>
    %141 = tpu.matmul %137, %140, %cst_49 {dimension_numbers = #tpu.dot_dimension_numbers<[1], [0], [0], [1], [0, 0, 1, 1], [], []>} : vector<4x4xf32>, vector<4x8xf32>, vector<4x8xf32> -> vector<4x8xf32>
    %142 = vector.broadcast %136 : vector<4x1xf32> to vector<4x8xf32>
    %143 = arith.addf %141, %142 : vector<4x8xf32>
    %c0_50 = arith.constant 0 : index
    %c0_51 = arith.constant 0 : index
    %c0_52 = arith.constant 0 : index
    %144 = vector.load %arg6[%c0_50, %c0_51, %c0_52] : memref<1x4x8xf32, #tpu.memory_space<vmem>>, vector<1x4x8xf32>
    %145 = vector.shape_cast %144 : vector<1x4x8xf32> to vector<4x8xf32>
    %146 = arith.subf %1, %143 : vector<4x8xf32>
    %147 = arith.mulf %146, %146 : vector<4x8xf32>
    %148 = arith.mulf %145, %147 : vector<4x8xf32>
    %149 = vector.shape_cast %148 : vector<4x8xf32> to vector<1x4x8xf32>
    %cst_53 = arith.constant dense<0.000000e+00> : vector<1xf32>
    %150 = vector.multi_reduction <add>, %149, %cst_53 [1, 2] : vector<1x4x8xf32> to vector<1xf32>
    %151 = vector.shape_cast %150 : vector<1xf32> to vector<1x1x1xf32>
    %152 = vector.extract %151[0, 0, 0] : f32 from vector<1x1x1xf32>
    %153 = vector.broadcast %152 : f32 to vector<1x1xf32>
    %154 = vector.shape_cast %145 : vector<4x8xf32> to vector<1x4x8xf32>
    %cst_54 = arith.constant dense<0.000000e+00> : vector<1xf32>
    %155 = vector.multi_reduction <add>, %154, %cst_54 [1, 2] : vector<1x4x8xf32> to vector<1xf32>
    %156 = vector.shape_cast %155 : vector<1xf32> to vector<1x1x1xf32>
    %157 = vector.extract %156[0, 0, 0] : f32 from vector<1x1x1xf32>
    %158 = vector.broadcast %157 : f32 to vector<1x1xf32>
    %cst_55 = arith.constant 9.99999971E-10 : f32
    %159 = vector.broadcast %cst_55 : f32 to vector<1x1xf32>
    %160 = arith.addf %158, %159 : vector<1x1xf32>
    %161 = arith.divf %153, %160 : vector<1x1xf32>
    %c0_56 = arith.constant 0 : index
    %c0_57 = arith.constant 0 : index
    %c0_58 = arith.constant 0 : index
    %162 = vector.load %arg12[%c0_56, %c0_57, %c0_58] : memref<1x1x1xf32, #tpu.memory_space<vmem>>, vector<1x1x1xf32>
    %163 = vector.shape_cast %162 : vector<1x1x1xf32> to vector<1x1xf32>
    %164 = vector.shape_cast %161 : vector<1x1xf32> to vector<1x1x1xf32>
    tpu.vector_store %arg12[%c0_56, %c0_57, %c0_58], %164 {strides = array<i32>} : memref<1x1x1xf32, #tpu.memory_space<vmem>>, vector<1x1x1xf32>,
    return
  }
  func.func @transform_0(%arg0: i32) -> (i32, i32, i32) {
    %c0_i32 = arith.constant 0 : i32
    %c0_i32_0 = arith.constant 0 : i32
    %c0_i32_1 = arith.constant 0 : i32
    return %arg0, %c0_i32, %c0_i32_0 : i32, i32, i32
  }
  func.func @transform_1(%arg0: i32) -> (i32, i32, i32) {
    %c0_i32 = arith.constant 0 : i32
    %c0_i32_0 = arith.constant 0 : i32
    %c0_i32_1 = arith.constant 0 : i32
    return %arg0, %c0_i32, %c0_i32_0 : i32, i32, i32
  }
  func.func @transform_2(%arg0: i32) -> (i32, i32, i32) {
    %c0_i32 = arith.constant 0 : i32
    %c0_i32_0 = arith.constant 0 : i32
    %c0_i32_1 = arith.constant 0 : i32
    return %arg0, %c0_i32, %c0_i32_0 : i32, i32, i32
  }
  func.func @transform_3(%arg0: i32) -> (i32, i32, i32) {
    %c0_i32 = arith.constant 0 : i32
    %c0_i32_0 = arith.constant 0 : i32
    %c0_i32_1 = arith.constant 0 : i32
    return %arg0, %c0_i32, %c0_i32_0 : i32, i32, i32
  }
  func.func @transform_4(%arg0: i32) -> (i32, i32, i32) {
    %c0_i32 = arith.constant 0 : i32
    %c0_i32_0 = arith.constant 0 : i32
    %c0_i32_1 = arith.constant 0 : i32
    return %arg0, %c0_i32, %c0_i32_0 : i32, i32, i32
  }
  func.func @transform_5(%arg0: i32) -> (i32, i32, i32) {
    %c0_i32 = arith.constant 0 : i32
    %c0_i32_0 = arith.constant 0 : i32
    %c0_i32_1 = arith.constant 0 : i32
    return %arg0, %c0_i32, %c0_i32_0 : i32, i32, i32
  }
  func.func @transform_6(%arg0: i32) -> (i32, i32) {
    %c0_i32 = arith.constant 0 : i32
    %c0_i32_0 = arith.constant 0 : i32
    %c0_i32_1 = arith.constant 0 : i32
    return %c0_i32, %c0_i32_0 : i32, i32
  }
  func.func @transform_7(%arg0: i32) -> (i32, i32) {
    %c0_i32 = arith.constant 0 : i32
    %c0_i32_0 = arith.constant 0 : i32
    %c0_i32_1 = arith.constant 0 : i32
    return %c0_i32, %c0_i32_0 : i32, i32
  }
  func.func @transform_8(%arg0: i32) -> (i32, i32) {
    %c0_i32 = arith.constant 0 : i32
    %c0_i32_0 = arith.constant 0 : i32
    %c0_i32_1 = arith.constant 0 : i32
    return %c0_i32, %c0_i32_0 : i32, i32
  }
  func.func @transform_9(%arg0: i32) -> (i32, i32) {
    %c0_i32 = arith.constant 0 : i32
    %c0_i32_0 = arith.constant 0 : i32
    %c0_i32_1 = arith.constant 0 : i32
    return %c0_i32, %c0_i32_0 : i32, i32
  }
  func.func @transform_10(%arg0: i32) -> (i32, i32, i32) {
    %c0_i32 = arith.constant 0 : i32
    %c0_i32_0 = arith.constant 0 : i32
    %c0_i32_1 = arith.constant 0 : i32
    return %arg0, %c0_i32, %c0_i32_0 : i32, i32, i32
  }
  func.func @transform_11(%arg0: i32) -> (i32, i32, i32) {
    %c0_i32 = arith.constant 0 : i32
    %c0_i32_0 = arith.constant 0 : i32
    %c0_i32_1 = arith.constant 0 : i32
    return %arg0, %c0_i32, %c0_i32_0 : i32, i32, i32
  }
}

</mosaic_0001>

<llo_original>
// kernel: tpu_custom_call.1
$region0: #{tpu_custom_call.1}
  #allocation0 [shape = 'u32[]', space=smem, size = 0x4, offset = 0x4, fixed_abs, tag = 'smem constant byte address 0x4 - core index']
  #allocation1 [shape = 'u32[144,128]{1,0:T(1,128)}', space=vmem, size = 0x12000, scoped, tag = 'internal scratch']
  %s0 = inlined_call_operand.hbm [shape: f32[8,4,8], index: 0, kind: input, shape index: {}]
  %s1 = inlined_call_operand.hbm [shape: f32[8,4,8], index: 1, kind: input, shape index: {}]
  %s2 = inlined_call_operand.hbm [shape: f32[8,4,8], index: 2, kind: input, shape index: {}]
  %s3 = inlined_call_operand.vmem [shape: f32[8,1,128], index: 3, kind: input, shape index: {}]
  %s4 = inlined_call_operand.hbm [shape: f32[8,4,8], index: 4, kind: input, shape index: {}]
  %s5 = inlined_call_operand.hbm [shape: f32[8,4,8], index: 5, kind: input, shape index: {}]
  %s6 = inlined_call_operand.vmem [shape: f32[4,1], index: 6, kind: input, shape index: {}]
  %s7 = inlined_call_operand.vmem [shape: f32[4,4], index: 7, kind: input, shape index: {}]
  %s8 = inlined_call_operand.vmem [shape: f32[12,128], index: 8, kind: input, shape index: {}]
  %s9 = inlined_call_operand.vmem [shape: f32[1,128], index: 9, kind: input, shape index: {}]
  %s10 = inlined_call_operand.hbm [shape: f32[8,128,128], index: 10, kind: output, shape index: {0}]
  %s11 = inlined_call_operand.vmem [shape: f32[8,1,1], index: 11, kind: output, shape index: {1}]
  %12 = xla_tuple %s10, %s11
  %s13 = sld [smem:[#allocation0]]
  $region101: #{tpu_custom_call.1} parent=0
    _
  %s15 = ssub.s32 1, %s13
  %s16 = scalar_select 0, %s15, %s13
  $region1: #{tpu_custom_call.1} parent=0
    #allocation2 [shape = 'u8[4096]{0}', space=vmem, size = 0x1000, scoped, tag = 'input window, operand 0']
    #allocation3 [shape = 's32[2]{0}', space=sflag, size = 0x8, scoped, tag = 'scoped memory for tpu_custom_call.1']
    #allocation4 [shape = 's32[2]{0}', space=sflag, size = 0x8, scoped, tag = 'scoped memory for tpu_custom_call.1']
    #allocation5 [shape = 'u8[4096]{0}', space=vmem, size = 0x1000, scoped, tag = 'input window, operand 1']
    #allocation6 [shape = 's32[2]{0}', space=sflag, size = 0x8, scoped, tag = 'scoped memory for tpu_custom_call.1']
    #allocation7 [shape = 'u8[4096]{0}', space=vmem, size = 0x1000, scoped, tag = 'input window, operand 2']
    #allocation8 [shape = 'u8[4096]{0}', space=vmem, size = 0x1000, scoped, tag = 'input window, operand 4']
    #allocation9 [shape = 's32[2]{0}', space=sflag, size = 0x8, scoped, tag = 'scoped memory for tpu_custom_call.1']
    #allocation10 [shape = 'u8[4096]{0}', space=vmem, size = 0x1000, scoped, tag = 'input window, operand 5']
    #allocation11 [shape = 'u8[131072]{0}', space=vmem, size = 0x20000, scoped, tag = 'output window, operand 0']
    %17 = vsyncpa [#allocation3], 0
    %s18 = scalar_lea.sflag [#allocation3], 1
    %19 = vsyncpa %s18, 0
    %20 = vsyncpa [#allocation6], 0
    %s21 = scalar_lea.sflag [#allocation6], 1
    %22 = vsyncpa %s21, 0
    %23 = vsyncpa [#allocation9], 0
    %s24 = scalar_lea.sflag [#allocation9], 1
    %25 = vsyncpa %s24, 0
    %26 = vsyncpa [#allocation4], 0
    %s27 = scalar_lea.sflag [#allocation4], 1
    %28 = vsyncpa %s27, 0
    loop: start=0, step=1, limit=10
    $region2: #{tpu_custom_call.1} parent=1 // loop_pre_header
      _
    $region3: #{tpu_custom_call.1} parent=1 // loop_header
      %s30 = sphi 0, %s34
      %p31 = scmp.ge.s32.totalorder %s30, 10
      %s40 = sphi 0, %s42
      %s43 = sphi 0, %s40
      %s44 = sphi 0, %s43
      %s60 = sphi 0, %s44
      %s66 = sphi 0, %s68
      %s69 = sphi 0, %s66
      %s70 = sphi 0, %s69
      %s86 = sphi 0, %s70
      %s92 = sphi 0, %s94
      %s95 = sphi 0, %s92
      %s96 = sphi 0, %s95
      %s112 = sphi 0, %s96
      %s118 = sphi 0, %s120
      %s121 = sphi 0, %s118
      %s122 = sphi 0, %s121
      %s138 = sphi 0, %s122
      %s144 = sphi 0, %s146
      %s147 = sphi 0, %s144
      %s148 = sphi 0, %s147
      %s164 = sphi 0, %s148
      %s170 = sphi 0, %s172
      %s173 = sphi 0, %s170
      %s174 = sphi 0, %s173
      %s190 = sphi 0, %s174
      %s194 = sphi 0, %s194
      %s196 = sphi 0, %s194
      %s197 = sphi 0, %s196
      %s211 = sphi 0, %s197
      %s215 = sphi 0, %s215
      %s217 = sphi 0, %s215
      %s218 = sphi 0, %s217
      %s232 = sphi 0, %s218
      %s236 = sphi 0, %s236
      %s238 = sphi 0, %s236
      %s239 = sphi 0, %s238
      %s253 = sphi 0, %s239
      %s257 = sphi 0, %s257
      %s259 = sphi 0, %s257
      %s260 = sphi 0, %s259
      %s274 = sphi 0, %s260
      %s280 = sphi 0, %s282
      %s283 = sphi 0, %s280
      %s284 = sphi 0, %s283
      %s300 = sphi 0, %s284
      %s306 = sphi 0, %s308
      %s309 = sphi 0, %s306
      %s310 = sphi 0, %s309
      %s326 = sphi 0, %s310
    $region4: #{tpu_custom_call.1} parent=1 // loop_header_branch
      %33 = sbr.rel (%p31) target = $region8
    $region5: #{tpu_custom_call.1} parent=1 // loop_body
      %s35 = ssub.s32 %s30, 1
      %s36 = ssub.s32 %s30, 2
      %s37 = sadd.s32 %s30, 1
      %s38 = ssub.s32 %s30, %s37
      %p39 = scmp.eq.s32.totalorder %s38, 0
      %s41 = sadd.s32 %s40, 1
      %s42 = scalar_select %p39, %s40, %s41
      %p45 = pneg %p39
      %p46 = scmp.eq.s32.totalorder %s30, 7
      %p47 = por %p45, %p46
      %p48 = scmp.ne.s32.totalorder %s40, %s43
      %p49 = scmp.eq.s32.totalorder %s30, 0
      %p50 = por %p48, %p49
      %p51 = scmp.ne.s32.totalorder %s40, %s43
      %p52 = scmp.eq.s32.totalorder %s35, 7
      %p53 = por %p51, %p52
      %p54 = scmp.ne.s32.totalorder %s43, %s44
      %p55 = scmp.eq.s32.totalorder %s35, 0
      %p56 = por %p54, %p55
      %p57 = scmp.ne.s32.totalorder %s43, %s44
      %p58 = scmp.eq.s32.totalorder %s36, 7
      %p59 = por %p57, %p58
      %p61 = scmp.ne.s32.totalorder %s44, %s60
      %p62 = scmp.eq.s32.totalorder %s36, 0
      %p63 = por %p61, %p62
      %s64 = ssub.s32 %s30, %s37
      %p65 = scmp.eq.s32.totalorder %s64, 0
      %s67 = sadd.s32 %s66, 1
      %s68 = scalar_select %p65, %s66, %s67
      %p71 = pneg %p65
      %p72 = scmp.eq.s32.totalorder %s30, 7
      %p73 = por %p71, %p72
      %p74 = scmp.ne.s32.totalorder %s66, %s69
      %p75 = scmp.eq.s32.totalorder %s30, 0
      %p76 = por %p74, %p75
      %p77 = scmp.ne.s32.totalorder %s66, %s69
      %p78 = scmp.eq.s32.totalorder %s35, 7
      %p79 = por %p77, %p78
      %p80 = scmp.ne.s32.totalorder %s69, %s70
      %p81 = scmp.eq.s32.totalorder %s35, 0
      %p82 = por %p80, %p81
      %p83 = scmp.ne.s32.totalorder %s69, %s70
      %p84 = scmp.eq.s32.totalorder %s36, 7
      %p85 = por %p83, %p84
      %p87 = scmp.ne.s32.totalorder %s70, %s86
      %p88 = scmp.eq.s32.totalorder %s36, 0
      %p89 = por %p87, %p88
      %s90 = ssub.s32 %s30, %s37
      %p91 = scmp.eq.s32.totalorder %s90, 0
      %s93 = sadd.s32 %s92, 1
      %s94 = scalar_select %p91, %s92, %s93
      %p97 = pneg %p91
      %p98 = scmp.eq.s32.totalorder %s30, 7
      %p99 = por %p97, %p98
      %p100 = scmp.ne.s32.totalorder %s92, %s95
      %p101 = scmp.eq.s32.totalorder %s30, 0
      %p102 = por %p100, %p101
      %p103 = scmp.ne.s32.totalorder %s92, %s95
      %p104 = scmp.eq.s32.totalorder %s35, 7
      %p105 = por %p103, %p104
      %p106 = scmp.ne.s32.totalorder %s95, %s96
      %p107 = scmp.eq.s32.totalorder %s35, 0
      %p108 = por %p106, %p107
      %p109 = scmp.ne.s32.totalorder %s95, %s96
      %p110 = scmp.eq.s32.totalorder %s36, 7
      %p111 = por %p109, %p110
      %p113 = scmp.ne.s32.totalorder %s96, %s112
      %p114 = scmp.eq.s32.totalorder %s36, 0
      %p115 = por %p113, %p114
      %s116 = ssub.s32 %s30, %s37
      %p117 = scmp.eq.s32.totalorder %s116, 0
      %s119 = sadd.s32 %s118, 1
      %s120 = scalar_select %p117, %s118, %s119
      %p123 = pneg %p117
      %p124 = scmp.eq.s32.totalorder %s30, 7
      %p125 = por %p123, %p124
      %p126 = scmp.ne.s32.totalorder %s118, %s121
      %p127 = scmp.eq.s32.totalorder %s30, 0
      %p128 = por %p126, %p127
      %p129 = scmp.ne.s32.totalorder %s118, %s121
      %p130 = scmp.eq.s32.totalorder %s35, 7
      %p131 = por %p129, %p130
      %p132 = scmp.ne.s32.totalorder %s121, %s122
      %p133 = scmp.eq.s32.totalorder %s35, 0
      %p134 = por %p132, %p133
      %p135 = scmp.ne.s32.totalorder %s121, %s122
      %p136 = scmp.eq.s32.totalorder %s36, 7
      %p137 = por %p135, %p136
      %p139 = scmp.ne.s32.totalorder %s122, %s138
      %p140 = scmp.eq.s32.totalorder %s36, 0
      %p141 = por %p139, %p140
      %s142 = ssub.s32 %s30, %s37
      %p143 = scmp.eq.s32.totalorder %s142, 0
      %s145 = sadd.s32 %s144, 1
      %s146 = scalar_select %p143, %s144, %s145
      %p149 = pneg %p143
      %p150 = scmp.eq.s32.totalorder %s30, 7
      %p151 = por %p149, %p150
      %p152 = scmp.ne.s32.totalorder %s144, %s147
      %p153 = scmp.eq.s32.totalorder %s30, 0
      %p154 = por %p152, %p153
      %p155 = scmp.ne.s32.totalorder %s144, %s147
      %p156 = scmp.eq.s32.totalorder %s35, 7
      %p157 = por %p155, %p156
      %p158 = scmp.ne.s32.totalorder %s147, %s148
      %p159 = scmp.eq.s32.totalorder %s35, 0
      %p160 = por %p158, %p159
      %p161 = scmp.ne.s32.totalorder %s147, %s148
      %p162 = scmp.eq.s32.totalorder %s36, 7
      %p163 = por %p161, %p162
      %p165 = scmp.ne.s32.totalorder %s148, %s164
      %p166 = scmp.eq.s32.totalorder %s36, 0
      %p167 = por %p165, %p166
      %s168 = ssub.s32 %s30, %s37
      %p169 = scmp.eq.s32.totalorder %s168, 0
      %s171 = sadd.s32 %s170, 1
      %s172 = scalar_select %p169, %s170, %s171
      %p175 = pneg %p169
      %p176 = scmp.eq.s32.totalorder %s30, 7
      %p177 = por %p175, %p176
      %p178 = scmp.ne.s32.totalorder %s170, %s173
      %p179 = scmp.eq.s32.totalorder %s30, 0
      %p180 = por %p178, %p179
      %p181 = scmp.ne.s32.totalorder %s170, %s173
      %p182 = scmp.eq.s32.totalorder %s35, 7
      %p183 = por %p181, %p182
      %p184 = scmp.ne.s32.totalorder %s173, %s174
      %p185 = scmp.eq.s32.totalorder %s35, 0
      %p186 = por %p184, %p185
      %p187 = scmp.ne.s32.totalorder %s173, %s174
      %p188 = scmp.eq.s32.totalorder %s36, 7
      %p189 = por %p187, %p188
      %p191 = scmp.ne.s32.totalorder %s174, %s190
      %p192 = scmp.eq.s32.totalorder %s36, 0
      %p193 = por %p191, %p192
      %s195 = sadd.s32 %s194, 1
      %p198 = scmp.eq.s32.totalorder %s30, 7
      %p199 = scmp.ne.s32.totalorder %s194, %s196
      %p200 = scmp.eq.s32.totalorder %s30, 0
      %p201 = por %p199, %p200
      %p202 = scmp.ne.s32.totalorder %s194, %s196
      %p203 = scmp.eq.s32.totalorder %s35, 7
      %p204 = por %p202, %p203
      %p205 = scmp.ne.s32.totalorder %s196, %s197
      %p206 = scmp.eq.s32.totalorder %s35, 0
      %p207 = por %p205, %p206
      %p208 = scmp.ne.s32.totalorder %s196, %s197
      %p209 = scmp.eq.s32.totalorder %s36, 7
      %p210 = por %p208, %p209
      %p212 = scmp.ne.s32.totalorder %s197, %s211
      %p213 = scmp.eq.s32.totalorder %s36, 0
      %p214 = por %p212, %p213
      %s216 = sadd.s32 %s215, 1
      %p219 = scmp.eq.s32.totalorder %s30, 7
      %p220 = scmp.ne.s32.totalorder %s215, %s217
      %p221 = scmp.eq.s32.totalorder %s30, 0
      %p222 = por %p220, %p221
      %p223 = scmp.ne.s32.totalorder %s215, %s217
      %p224 = scmp.eq.s32.totalorder %s35, 7
      %p225 = por %p223, %p224
      %p226 = scmp.ne.s32.totalorder %s217, %s218
      %p227 = scmp.eq.s32.totalorder %s35, 0
      %p228 = por %p226, %p227
      %p229 = scmp.ne.s32.totalorder %s217, %s218
      %p230 = scmp.eq.s32.totalorder %s36, 7
      %p231 = por %p229, %p230
      %p233 = scmp.ne.s32.totalorder %s218, %s232
      %p234 = scmp.eq.s32.totalorder %s36, 0
      %p235 = por %p233, %p234
      %s237 = sadd.s32 %s236, 1
      %p240 = scmp.eq.s32.totalorder %s30, 7
      %p241 = scmp.ne.s32.totalorder %s236, %s238
      %p242 = scmp.eq.s32.totalorder %s30, 0
      %p243 = por %p241, %p242
      %p244 = scmp.ne.s32.totalorder %s236, %s238
      %p245 = scmp.eq.s32.totalorder %s35, 7
      %p246 = por %p244, %p245
      %p247 = scmp.ne.s32.totalorder %s238, %s239
      %p248 = scmp.eq.s32.totalorder %s35, 0
      %p249 = por %p247, %p248
      %p250 = scmp.ne.s32.totalorder %s238, %s239
      %p251 = scmp.eq.s32.totalorder %s36, 7
      %p252 = por %p250, %p251
      %p254 = scmp.ne.s32.totalorder %s239, %s253
      %p255 = scmp.eq.s32.totalorder %s36, 0
      %p256 = por %p254, %p255
      %s258 = sadd.s32 %s257, 1
      %p261 = scmp.eq.s32.totalorder %s30, 7
      %p262 = scmp.ne.s32.totalorder %s257, %s259
      %p263 = scmp.eq.s32.totalorder %s30, 0
      %p264 = por %p262, %p263
      %p265 = scmp.ne.s32.totalorder %s257, %s259
      %p266 = scmp.eq.s32.totalorder %s35, 7
      %p267 = por %p265, %p266
      %p268 = scmp.ne.s32.totalorder %s259, %s260
      %p269 = scmp.eq.s32.totalorder %s35, 0
      %p270 = por %p268, %p269
      %p271 = scmp.ne.s32.totalorder %s259, %s260
      %p272 = scmp.eq.s32.totalorder %s36, 7
      %p273 = por %p271, %p272
      %p275 = scmp.ne.s32.totalorder %s260, %s274
      %p276 = scmp.eq.s32.totalorder %s36, 0
      %p277 = por %p275, %p276
      %s278 = ssub.s32 %s30, %s37
      %p279 = scmp.eq.s32.totalorder %s278, 0
      %s281 = sadd.s32 %s280, 1
      %s282 = scalar_select %p279, %s280, %s281
      %p285 = pneg %p279
      %p286 = scmp.eq.s32.totalorder %s30, 7
      %p287 = por %p285, %p286
      %p288 = scmp.ne.s32.totalorder %s280, %s283
      %p289 = scmp.eq.s32.totalorder %s30, 0
      %p290 = por %p288, %p289
      %p291 = scmp.ne.s32.totalorder %s280, %s283
      %p292 = scmp.eq.s32.totalorder %s35, 7
      %p293 = por %p291, %p292
      %p294 = scmp.ne.s32.totalorder %s283, %s284
      %p295 = scmp.eq.s32.totalorder %s35, 0
      %p296 = por %p294, %p295
      %p297 = scmp.ne.s32.totalorder %s283, %s284
      %p298 = scmp.eq.s32.totalorder %s36, 7
      %p299 = por %p297, %p298
      %p301 = scmp.ne.s32.totalorder %s284, %s300
      %p302 = scmp.eq.s32.totalorder %s36, 0
      %p303 = por %p301, %p302
      %s304 = ssub.s32 %s30, %s37
      %p305 = scmp.eq.s32.totalorder %s304, 0
      %s307 = sadd.s32 %s306, 1
      %s308 = scalar_select %p305, %s306, %s307
      %p311 = pneg %p305
      %p312 = scmp.eq.s32.totalorder %s30, 7
      %p313 = por %p311, %p312
      %p314 = scmp.ne.s32.totalorder %s306, %s309
      %p315 = scmp.eq.s32.totalorder %s30, 0
      %p316 = por %p314, %p315
      %p317 = scmp.ne.s32.totalorder %s306, %s309
      %p318 = scmp.eq.s32.totalorder %s35, 7
      %p319 = por %p317, %p318
      %p320 = scmp.ne.s32.totalorder %s309, %s310
      %p321 = scmp.eq.s32.totalorder %s35, 0
      %p322 = por %p320, %p321
      %p323 = scmp.ne.s32.totalorder %s309, %s310
      %p324 = scmp.eq.s32.totalorder %s36, 7
      %p325 = por %p323, %p324
      %p327 = scmp.ne.s32.totalorder %s310, %s326
      %p328 = scmp.eq.s32.totalorder %s36, 0
      %p329 = por %p327, %p328
      %p330 = scmp.le.s32.totalorder 1, %s30
      %p331 = scmp.lt.s32.totalorder %s30, 9
      %p332 = pnand %p330, %p331
      %p333 = pneg %p332
      // Predicated region
      $region9: #{tpu_custom_call.1} parent=5 // pred_check
        _
      $region10: #{tpu_custom_call.1} parent=5 // pred_check_branch
        %335 = sbr.rel (%p332) target = $region12
      $region11: #{tpu_custom_call.1} parent=5 // pred_region
        %s336 = ssub.s32 %s30, 1
        // Predicated region
        $region13: #{tpu_custom_call.1} parent=11 // pred_check
          %p337 = pneg %p207
        $region14: #{tpu_custom_call.1} parent=11 // pred_check_branch
          %339 = sbr.rel (%p337) target = $region16
        $region15: #{tpu_custom_call.1} parent=11 // pred_region
          _
        $region16: #{tpu_custom_call.1} parent=11 // pred_fallthru
          _
        // Predicated region
        $region17: #{tpu_custom_call.1} parent=11 // pred_check
          %p340 = pneg %p228
        $region18: #{tpu_custom_call.1} parent=11 // pred_check_branch
          %342 = sbr.rel (%p340) target = $region20
        $region19: #{tpu_custom_call.1} parent=11 // pred_region
          _
        $region20: #{tpu_custom_call.1} parent=11 // pred_fallthru
          _
        // Predicated region
        $region21: #{tpu_custom_call.1} parent=11 // pred_check
          %p343 = pneg %p249
        $region22: #{tpu_custom_call.1} parent=11 // pred_check_branch
          %345 = sbr.rel (%p343) target = $region24
        $region23: #{tpu_custom_call.1} parent=11 // pred_region
          _
        $region24: #{tpu_custom_call.1} parent=11 // pred_fallthru
          _
        // Predicated region
        $region25: #{tpu_custom_call.1} parent=11 // pred_check
          %p346 = pneg %p270
        $region26: #{tpu_custom_call.1} parent=11 // pred_check_branch
          %348 = sbr.rel (%p346) target = $region28
        $region27: #{tpu_custom_call.1} parent=11 // pred_region
          _
        $region28: #{tpu_custom_call.1} parent=11 // pred_fallthru
          _
      $region12: #{tpu_custom_call.1} parent=5 // pred_fallthru
        _
      %p349 = scmp.lt.s32.totalorder %s30, 8
      // Predicated region
      $region29: #{tpu_custom_call.1} parent=5 // pred_check
        %p350 = pneg %p349
      $region30: #{tpu_custom_call.1} parent=5 // pred_check_branch
        %352 = sbr.rel (%p350) target = $region32
      $region31: #{tpu_custom_call.1} parent=5 // pred_region
        // Predicated region
        $region33: #{tpu_custom_call.1} parent=31 // pred_check
          %p353 = pneg %p50
        $region34: #{tpu_custom_call.1} parent=31 // pred_check_branch
          %355 = sbr.rel (%p353) target = $region36
        $region35: #{tpu_custom_call.1} parent=31 // pred_region
          %s356 = sand.u32 %s40, 1
          %s357 = scalar_lea.sflag [#allocation3], %s356
          %s358 = sand.u32 %s40, 1
          %s359 = smul.addr %s358, 4
          %s360 = scalar_lea.vmem [#allocation2], %s359
          %s362 = ssub.s32 64, 64
          %363 = vsyncadd %s357, %s362
          %s364 = smul.addr %s30, 64
          %s365 = scalar_lea.hbm %s0, %s364
          %s367 = sshll.u32 %s360, 4
          %s368 = int_to_ptr.vmem [resolvable:$true] %s367
          %370 = dma.hbm_to_vmem [thread:$0]  %s365, 64, %s368, %s357
        $region36: #{tpu_custom_call.1} parent=31 // pred_fallthru
          _
        // Predicated region
        $region37: #{tpu_custom_call.1} parent=31 // pred_check
          %p371 = pneg %p76
        $region38: #{tpu_custom_call.1} parent=31 // pred_check_branch
          %373 = sbr.rel (%p371) target = $region40
        $region39: #{tpu_custom_call.1} parent=31 // pred_region
          %s374 = sand.u32 %s30, 1
          %s375 = scalar_lea.sflag [#allocation6], %s374
          %s376 = sand.u32 %s66, 1
          %s377 = smul.addr %s376, 4
          %s378 = scalar_lea.vmem [#allocation5], %s377
          %s380 = ssub.s32 64, 64
          %381 = vsyncadd %s375, %s380
          %s382 = smul.addr %s30, 64
          %s383 = scalar_lea.hbm %s1, %s382
          %s385 = sshll.u32 %s378, 4
          %s386 = int_to_ptr.vmem [resolvable:$true] %s385
          %388 = dma.hbm_to_vmem [thread:$0]  %s383, 64, %s386, %s375
        $region40: #{tpu_custom_call.1} parent=31 // pred_fallthru
          _
        // Predicated region
        $region41: #{tpu_custom_call.1} parent=31 // pred_check
          %p389 = pneg %p102
        $region42: #{tpu_custom_call.1} parent=31 // pred_check_branch
          %391 = sbr.rel (%p389) target = $region44
        $region43: #{tpu_custom_call.1} parent=31 // pred_region
          %s392 = sand.u32 %s30, 1
          %s393 = scalar_lea.sflag [#allocation6], %s392
          %s394 = sand.u32 %s92, 1
          %s395 = smul.addr %s394, 4
          %s396 = scalar_lea.vmem [#allocation7], %s395
          %s398 = ssub.s32 64, 64
          %399 = vsyncadd %s393, %s398
          %s400 = smul.addr %s30, 64
          %s401 = scalar_lea.hbm %s2, %s400
          %s403 = sshll.u32 %s396, 4
          %s404 = int_to_ptr.vmem [resolvable:$true] %s403
          %406 = dma.hbm_to_vmem [thread:$0]  %s401, 64, %s404, %s393
        $region44: #{tpu_custom_call.1} parent=31 // pred_fallthru
          _
        // Predicated region
        $region45: #{tpu_custom_call.1} parent=31 // pred_check
          %p407 = pneg %p128
        $region46: #{tpu_custom_call.1} parent=31 // pred_check_branch
          %409 = sbr.rel (%p407) target = $region48
        $region47: #{tpu_custom_call.1} parent=31 // pred_region
          %p410 = scmp.lt.s32.totalorder %s30, 7
          %s411 = scalar_select %p410, %s30, 7
          %s412 = scalar_lea.vmem %s3, %s411
        $region48: #{tpu_custom_call.1} parent=31 // pred_fallthru
          _
        // Predicated region
        $region49: #{tpu_custom_call.1} parent=31 // pred_check
          %p413 = pneg %p154
        $region50: #{tpu_custom_call.1} parent=31 // pred_check_branch
          %415 = sbr.rel (%p413) target = $region52
        $region51: #{tpu_custom_call.1} parent=31 // pred_region
          %s416 = sand.u32 %s30, 1
          %s417 = scalar_lea.sflag [#allocation9], %s416
          %s418 = sand.u32 %s144, 1
          %s419 = smul.addr %s418, 4
          %s420 = scalar_lea.vmem [#allocation8], %s419
          %s422 = ssub.s32 64, 64
          %423 = vsyncadd %s417, %s422
          %s424 = smul.addr %s30, 64
          %s425 = scalar_lea.hbm %s4, %s424
          %s427 = sshll.u32 %s420, 4
          %s428 = int_to_ptr.vmem [resolvable:$true] %s427
          %430 = dma.hbm_to_vmem [thread:$0]  %s425, 64, %s428, %s417
        $region52: #{tpu_custom_call.1} parent=31 // pred_fallthru
          _
        // Predicated region
        $region53: #{tpu_custom_call.1} parent=31 // pred_check
          %p431 = pneg %p180
        $region54: #{tpu_custom_call.1} parent=31 // pred_check_branch
          %433 = sbr.rel (%p431) target = $region56
        $region55: #{tpu_custom_call.1} parent=31 // pred_region
          %s434 = sand.u32 %s30, 1
          %s435 = scalar_lea.sflag [#allocation9], %s434
          %s436 = sand.u32 %s170, 1
          %s437 = smul.addr %s436, 4
          %s438 = scalar_lea.vmem [#allocation10], %s437
          %s440 = ssub.s32 64, 64
          %441 = vsyncadd %s435, %s440
          %s442 = smul.addr %s30, 64
          %s443 = scalar_lea.hbm %s5, %s442
          %s445 = sshll.u32 %s438, 4
          %s446 = int_to_ptr.vmem [resolvable:$true] %s445
          %448 = dma.hbm_to_vmem [thread:$0]  %s443, 64, %s446, %s435
        $region56: #{tpu_custom_call.1} parent=31 // pred_fallthru
          _
      $region32: #{tpu_custom_call.1} parent=5 // pred_fallthru
        _
      %p449 = scmp.le.s32.totalorder 1, %s30
      %p450 = scmp.lt.s32.totalorder %s30, 9
      %p451 = pnand %p449, %p450
      %p452 = pneg %p451
      // Predicated region
      $region57: #{tpu_custom_call.1} parent=5 // pred_check
        _
      $region58: #{tpu_custom_call.1} parent=5 // pred_check_branch
        %454 = sbr.rel (%p451) target = $region60
      $region59: #{tpu_custom_call.1} parent=5 // pred_region
        %s455 = ssub.s32 %s30, 1
        %s456 = sand.u32 %s43, 1
        %s457 = scalar_lea.sflag [#allocation3], %s456
        %s458 = sand.u32 %s43, 1
        %s459 = smul.addr %s458, 4
        %s460 = scalar_lea.vmem [#allocation2], %s459
        // Predicated region
        $region61: #{tpu_custom_call.1} parent=59 // pred_check
          %p461 = pneg %p56
        $region62: #{tpu_custom_call.1} parent=59 // pred_check_branch
          %463 = sbr.rel (%p461) target = $region64
        $region63: #{tpu_custom_call.1} parent=59 // pred_region
          %464 = dma.done %s457, 64
        $region64: #{tpu_custom_call.1} parent=59 // pred_fallthru
          _
        %s465 = sand.u32 %s35, 1
        %s466 = scalar_lea.sflag [#allocation6], %s465
        %s467 = sand.u32 %s69, 1
        %s468 = smul.addr %s467, 4
        %s469 = scalar_lea.vmem [#allocation5], %s468
        // Predicated region
        $region65: #{tpu_custom_call.1} parent=59 // pred_check
          %p470 = pneg %p82
        $region66: #{tpu_custom_call.1} parent=59 // pred_check_branch
          %472 = sbr.rel (%p470) target = $region68
        $region67: #{tpu_custom_call.1} parent=59 // pred_region
          %473 = dma.done %s466, 64
        $region68: #{tpu_custom_call.1} parent=59 // pred_fallthru
          _
        %s474 = sand.u32 %s35, 1
        %s475 = scalar_lea.sflag [#allocation6], %s474
        %s476 = sand.u32 %s95, 1
        %s477 = smul.addr %s476, 4
        %s478 = scalar_lea.vmem [#allocation7], %s477
        // Predicated region
        $region69: #{tpu_custom_call.1} parent=59 // pred_check
          %p479 = pneg %p108
        $region70: #{tpu_custom_call.1} parent=59 // pred_check_branch
          %481 = sbr.rel (%p479) target = $region72
        $region71: #{tpu_custom_call.1} parent=59 // pred_region
          %482 = dma.done %s475, 64
        $region72: #{tpu_custom_call.1} parent=59 // pred_fallthru
          _
        %s483 = sand.u32 %s35, 1
        %s484 = scalar_lea.sflag [#allocation9], %s483
        %s485 = sand.u32 %s147, 1
        %s486 = smul.addr %s485, 4
        %s487 = scalar_lea.vmem [#allocation8], %s486
        // Predicated region
        $region73: #{tpu_custom_call.1} parent=59 // pred_check
          %p488 = pneg %p160
        $region74: #{tpu_custom_call.1} parent=59 // pred_check_branch
          %490 = sbr.rel (%p488) target = $region76
        $region75: #{tpu_custom_call.1} parent=59 // pred_region
          %491 = dma.done %s484, 64
        $region76: #{tpu_custom_call.1} parent=59 // pred_fallthru
          _
        %s492 = sand.u32 %s35, 1
        %s493 = scalar_lea.sflag [#allocation9], %s492
        %s494 = sand.u32 %s173, 1
        %s495 = smul.addr %s494, 4
        %s496 = scalar_lea.vmem [#allocation10], %s495
        // Predicated region
        $region77: #{tpu_custom_call.1} parent=59 // pred_check
          %p497 = pneg %p186
        $region78: #{tpu_custom_call.1} parent=59 // pred_check_branch
          %499 = sbr.rel (%p497) target = $region80
        $region79: #{tpu_custom_call.1} parent=59 // pred_region
          %500 = dma.done %s493, 64
        $region80: #{tpu_custom_call.1} parent=59 // pred_fallthru
          _
        %s501 = sand.u32 %s43, 1
        %s502 = scalar_lea.sflag [#allocation3], %s501
        %s503 = sand.u32 %s43, 1
        %s504 = smul.addr %s503, 4
        %s505 = scalar_lea.vmem [#allocation2], %s504
        %p506 = pneg %p56
        %p507 = pneg %p53
        %s508 = sand.u32 %s35, 1
        %s509 = scalar_lea.sflag [#allocation6], %s508
        %s510 = sand.u32 %s69, 1
        %s511 = smul.addr %s510, 4
        %s512 = scalar_lea.vmem [#allocation5], %s511
        %p513 = pneg %p82
        %p514 = pneg %p79
        %s515 = sand.u32 %s35, 1
        %s516 = scalar_lea.sflag [#allocation6], %s515
        %s517 = sand.u32 %s95, 1
        %s518 = smul.addr %s517, 4
        %s519 = scalar_lea.vmem [#allocation7], %s518
        %p520 = pneg %p108
        %p521 = pneg %p105
        %p522 = scmp.lt.s32.totalorder %s35, 7
        %s523 = scalar_select %p522, %s35, 7
        %s524 = scalar_lea.vmem %s3, %s523
        %p525 = pneg %p134
        %p526 = pneg %p131
        %s527 = sand.u32 %s35, 1
        %s528 = scalar_lea.sflag [#allocation9], %s527
        %s529 = sand.u32 %s147, 1
        %s530 = smul.addr %s529, 4
        %s531 = scalar_lea.vmem [#allocation8], %s530
        %p532 = pneg %p160
        %p533 = pneg %p157
        %s534 = sand.u32 %s35, 1
        %s535 = scalar_lea.sflag [#allocation9], %s534
        %s536 = sand.u32 %s173, 1
        %s537 = smul.addr %s536, 4
        %s538 = scalar_lea.vmem [#allocation10], %s537
        %p539 = pneg %p186
        %p540 = pneg %p183
        %p541 = pneg %p207
        %p542 = pneg %p204
        %p543 = pneg %p228
        %p544 = pneg %p225
        %p545 = pneg %p249
        %p546 = pneg %p246
        %p547 = pneg %p270
        %p548 = pneg %p267
        %p549 = pneg %p296
        %p550 = pneg %p293
        %s551 = sand.u32 %s283, 1
        %s552 = scalar_lea.sflag [#allocation4], %s551
        %s553 = sand.u32 %s283, 1
        %s554 = smul.addr %s553, 128
        %s555 = scalar_lea.vmem [#allocation11], %s554
        %p556 = pneg %p322
        %p557 = pneg %p319
        %p558 = scmp.lt.s32.totalorder %s35, 7
        %s559 = scalar_select %p558, %s35, 7
        %s560 = scalar_lea.vmem %s11, %s559
        %p561 = scmp.lt.s32.totalorder %s35, 7
        %s562 = scalar_select %p561, %s35, 7
        %s563 = scalar_lea.vmem %s3, %s562
        %p564 = scmp.lt.s32.totalorder %s35, 7
        %s565 = scalar_select %p564, %s35, 7
        %s566 = scalar_lea.vmem %s11, %s565
        %v567 = vld [vmem:[%s460] sm:$0xf]
        %v568 = vld [vmem:[%s469] sm:$0xf]
        %v569 = vld [vmem:[%s478] sm:$0xf]
        %v570 = vld [vmem:[%s563] sm:$0x1]
        %v571 = vld [vmem:[%s6] sm:$0xf]
        %v574 = vunpack.c.l.s4 1966171168
        %v575 = vunpack.c.0.s8 %v574
        %v576 = vlaneseq
        %v577 = vshrl.u32 %v576, 7
        %v578 = vsub.s32 %v575, %v577
        %v579 = vrot.slane %v571, %v578
        %v580 = vcombine.high %v579, %v579
        %v582 = vunpack.c.l.s4 1966171168
        %v583 = vunpack.c.0.s8 %v582
        %v584 = vlaneseq
        %v585 = vshrl.u32 %v584, 7
        %v586 = vsub.s32 %v583, %v585
        %v587 = vrot.slane %v579, %v586
        %v589 = vunpack.c.l.s4 1966171168
        %v590 = vunpack.c.0.s8 %v589
        %v591 = vlaneseq
        %v592 = vshrl.u32 %v591, 7
        %v593 = vsub.s32 %v590, %v592
        %v594 = vrot.slane %v580, %v593
        %v595 = vcombine.high %v587, %v587
        %v596 = vcombine.high %v594, %v594
        %v597 = vlaneseq
        %v598 = vshrl.u32 %v597, 7
        %v599 = vsub.s32 0, %v598
        %v600 = vrot.slane %v567, %v599
        %602 = vbcast.lane.b32.xlu0 %v600, 256
        %v603 = vpop.permute.xlu0 %602
        %v604 = vlaneseq
        %v605 = vshrl.u32 %v604, 7
        %v606 = vsub.s32 1, %v605
        %v607 = vrot.slane %v567, %v606
        %609 = vbcast.lane.b32.xlu0 %v607, 256
        %v610 = vpop.permute.xlu0 %609
        %v611 = vlaneseq
        %v612 = vshrl.u32 %v611, 7
        %v613 = vsub.s32 2, %v612
        %v614 = vrot.slane %v567, %v613
        %616 = vbcast.lane.b32.xlu0 %v614, 256
        %v617 = vpop.permute.xlu0 %616
        %v618 = vlaneseq
        %v619 = vshrl.u32 %v618, 7
        %v620 = vsub.s32 3, %v619
        %v621 = vrot.slane %v567, %v620
        %623 = vbcast.lane.b32.xlu0 %v621, 256
        %v624 = vpop.permute.xlu0 %623
        %v625 = vadd.f32 %v568, 1e-09
        %v626 = vlog2.pop %v625
        %v627 = vmul.f32 %v626, 0.6931472
        %v628 = vlaneseq
        %v629 = vshrl.u32 %v628, 7
        %v630 = vsub.s32 0, %v629
        %v631 = vrot.slane %v627, %v630
        %633 = vbcast.lane.b32.xlu0 %v631, 256
        %v634 = vpop.permute.xlu0 %633
        %v635 = vlaneseq
        %v636 = vshrl.u32 %v635, 7
        %v637 = vsub.s32 1, %v636
        %v638 = vrot.slane %v627, %v637
        %640 = vbcast.lane.b32.xlu0 %v638, 256
        %v641 = vpop.permute.xlu0 %640
        %v642 = vlaneseq
        %v643 = vshrl.u32 %v642, 7
        %v644 = vsub.s32 2, %v643
        %v645 = vrot.slane %v627, %v644
        %647 = vbcast.lane.b32.xlu0 %v645, 256
        %v648 = vpop.permute.xlu0 %647
        %v649 = vlaneseq
        %v650 = vshrl.u32 %v649, 7
        %v651 = vsub.s32 3, %v650
        %v652 = vrot.slane %v627, %v651
        %654 = vbcast.lane.b32.xlu0 %v652, 256
        %v655 = vpop.permute.xlu0 %654
        %v656 = vlaneseq
        %v657 = vshrl.u32 %v656, 7
        %v658 = vsub.s32 0, %v657
        %v659 = vrot.slane %v569, %v658
        %661 = vbcast.lane.b32.xlu0 %v659, 256
        %v662 = vpop.permute.xlu0 %661
        %v663 = vlaneseq
        %v664 = vshrl.u32 %v663, 7
        %v665 = vsub.s32 1, %v664
        %v666 = vrot.slane %v569, %v665
        %668 = vbcast.lane.b32.xlu0 %v666, 256
        %v669 = vpop.permute.xlu0 %668
        %v670 = vlaneseq
        %v671 = vshrl.u32 %v670, 7
        %v672 = vsub.s32 2, %v671
        %v673 = vrot.slane %v569, %v672
        %675 = vbcast.lane.b32.xlu0 %v673, 256
        %v676 = vpop.permute.xlu0 %675
        %v677 = vlaneseq
        %v678 = vshrl.u32 %v677, 7
        %v679 = vsub.s32 3, %v678
        %v680 = vrot.slane %v569, %v679
        %682 = vbcast.lane.b32.xlu0 %v680, 256
        %v683 = vpop.permute.xlu0 %682
        %v685 = vlaneseq
        %v686 = vshrl.u32 %v685, 7
        %v687 = vsub.s32 0, %v686
        %v688 = vrot.slane %v570, %v687
        %v690 = vsub.f32 %v662, %v688
        %v691 = vsub.f32 %v669, %v688
        %v692 = vsub.f32 %v676, %v688
        %v693 = vsub.f32 %v683, %v688
        %v694 = vmul.f32 %v690, %v690
        %v695 = vmul.f32 %v691, %v691
        %v696 = vmul.f32 %v692, %v692
        %v697 = vmul.f32 %v693, %v693
        %v698 = vlaneseq
        %v699 = vshrl.u32 %v698, 7
        %v700 = vsub.s32 0, %v699
        %v701 = vrot.slane %v587, %v700
        %v702 = vlaneseq
        %v703 = vshrl.u32 %v702, 7
        %v704 = vsub.s32 0, %v703
        %v705 = vrot.slane %v594, %v704
        %v706 = vlaneseq
        %v707 = vshrl.u32 %v706, 7
        %v708 = vsub.s32 0, %v707
        %v709 = vrot.slane %v595, %v708
        %v710 = vlaneseq
        %v711 = vshrl.u32 %v710, 7
        %v712 = vsub.s32 0, %v711
        %v713 = vrot.slane %v596, %v712
        %714 = vset.pattern.permute.xlu0 0
        %715 = vperm.xlu0 %714, %v701
        %v716 = vpop.permute.xlu0 %715
        %718 = vset.pattern.permute.xlu0 0
        %719 = vperm.xlu0 %718, %v705
        %v720 = vpop.permute.xlu0 %719
        %722 = vset.pattern.permute.xlu0 0
        %723 = vperm.xlu0 %722, %v709
        %v724 = vpop.permute.xlu0 %723
        %726 = vset.pattern.permute.xlu0 0
        %727 = vperm.xlu0 %726, %v713
        %v728 = vpop.permute.xlu0 %727
        %v730 = vmul.f32 %v716, %v694
        %v731 = vmul.f32 %v720, %v695
        %v732 = vmul.f32 %v724, %v696
        %v733 = vmul.f32 %v728, %v697
        %v734 = vsub.f32 %v634, %v730
        %v735 = vsub.f32 %v641, %v731
        %v736 = vsub.f32 %v648, %v732
        %v737 = vsub.f32 %v655, %v733
        %v738 = vrot.slane %v734, 4
        %v739 = vmax.f32 %v734, %v738
        %v740 = vrot.slane %v739, 2
        %v741 = vmax.f32 %v739, %v740
        %v742 = vrot.slane %v741, 1
        %v743 = vmax.f32 %v741, %v742
        %v744 = vrot.slane %v735, 4
        %v745 = vmax.f32 %v735, %v744
        %v746 = vrot.slane %v745, 2
        %v747 = vmax.f32 %v745, %v746
        %v748 = vrot.slane %v747, 1
        %v749 = vmax.f32 %v747, %v748
        %v750 = vrot.slane %v736, 4
        %v751 = vmax.f32 %v736, %v750
        %v752 = vrot.slane %v751, 2
        %v753 = vmax.f32 %v751, %v752
        %v754 = vrot.slane %v753, 1
        %v755 = vmax.f32 %v753, %v754
        %v756 = vrot.slane %v737, 4
        %v757 = vmax.f32 %v737, %v756
        %v758 = vrot.slane %v757, 2
        %v759 = vmax.f32 %v757, %v758
        %v760 = vrot.slane %v759, 1
        %v761 = vmax.f32 %v759, %v760
        %v762 = vsub.f32 %v734, %v743
        %v763 = vsub.f32 %v735, %v749
        %v764 = vsub.f32 %v736, %v755
        %v765 = vsub.f32 %v737, %v761
        %v766 = vmul.f32 %v762, 1.442695
        %v767 = vpow.pop %v766
        %v768 = vmul.f32 %v763, 1.442695
        %v769 = vpow.pop %v768
        %v770 = vmul.f32 %v764, 1.442695
        %v771 = vpow.pop %v770
        %v772 = vmul.f32 %v765, 1.442695
        %v773 = vpow.pop %v772
        %v774 = vrot.slane %v767, 4
        %v775 = vadd.f32 %v767, %v774
        %v776 = vrot.slane %v775, 2
        %v777 = vadd.f32 %v775, %v776
        %v778 = vrot.slane %v777, 1
        %v779 = vadd.f32 %v777, %v778
        %v780 = vrot.slane %v769, 4
        %v781 = vadd.f32 %v769, %v780
        %v782 = vrot.slane %v781, 2
        %v783 = vadd.f32 %v781, %v782
        %v784 = vrot.slane %v783, 1
        %v785 = vadd.f32 %v783, %v784
        %v786 = vrot.slane %v771, 4
        %v787 = vadd.f32 %v771, %v786
        %v788 = vrot.slane %v787, 2
        %v789 = vadd.f32 %v787, %v788
        %v790 = vrot.slane %v789, 1
        %v791 = vadd.f32 %v789, %v790
        %v792 = vrot.slane %v773, 4
        %v793 = vadd.f32 %v773, %v792
        %v794 = vrot.slane %v793, 2
        %v795 = vadd.f32 %v793, %v794
        %v796 = vrot.slane %v795, 1
        %v797 = vadd.f32 %v795, %v796
        %v798 = vmul.f32 %v767, %v603
        %v799 = vmul.f32 %v769, %v610
        %v800 = vmul.f32 %v771, %v617
        %v801 = vmul.f32 %v773, %v624
        %v802 = vrot.slane %v798, 4
        %v803 = vadd.f32 %v798, %v802
        %v804 = vrot.slane %v803, 2
        %v805 = vadd.f32 %v803, %v804
        %v806 = vrot.slane %v805, 1
        %v807 = vadd.f32 %v805, %v806
        %v808 = vrot.slane %v799, 4
        %v809 = vadd.f32 %v799, %v808
        %v810 = vrot.slane %v809, 2
        %v811 = vadd.f32 %v809, %v810
        %v812 = vrot.slane %v811, 1
        %v813 = vadd.f32 %v811, %v812
        %v814 = vrot.slane %v800, 4
        %v815 = vadd.f32 %v800, %v814
        %v816 = vrot.slane %v815, 2
        %v817 = vadd.f32 %v815, %v816
        %v818 = vrot.slane %v817, 1
        %v819 = vadd.f32 %v817, %v818
        %v820 = vrot.slane %v801, 4
        %v821 = vadd.f32 %v801, %v820
        %v822 = vrot.slane %v821, 2
        %v823 = vadd.f32 %v821, %v822
        %v824 = vrot.slane %v823, 1
        %v825 = vadd.f32 %v823, %v824
        %v826 = vrcp.pop %v779
        %v827 = vrcp.pop %v785
        %v828 = vrcp.pop %v791
        %v829 = vrcp.pop %v797
        %v830 = vmul.f32 %v807, %v826
        %v831 = vmul.f32 %v813, %v827
        %v832 = vmul.f32 %v819, %v828
        %v833 = vmul.f32 %v825, %v829
        %v834 = vlog2.pop %v779
        %v835 = vmul.f32 %v834, 0.6931472
        %v836 = vlog2.pop %v785
        %v837 = vmul.f32 %v836, 0.6931472
        %v838 = vlog2.pop %v791
        %v839 = vmul.f32 %v838, 0.6931472
        %v840 = vlog2.pop %v797
        %v841 = vmul.f32 %v840, 0.6931472
        %v842 = vadd.f32 %v835, %v743
        %v843 = vadd.f32 %v837, %v749
        %v844 = vadd.f32 %v839, %v755
        %v845 = vadd.f32 %v841, %v761
        %v846 = vmul.f32 %v743, 1.442695
        %v847 = vpow.pop %v846
        %v848 = vmul.f32 %v749, 1.442695
        %v849 = vpow.pop %v848
        %v850 = vmul.f32 %v755, 1.442695
        %v851 = vpow.pop %v850
        %v852 = vmul.f32 %v761, 1.442695
        %v853 = vpow.pop %v852
        %v854 = vmul.f32 %v779, %v847
        %v855 = vmul.f32 %v785, %v849
        %v856 = vmul.f32 %v791, %v851
        %v857 = vmul.f32 %v797, %v853
        %v858 = vmul.f32 %v730, 10.0
        %v859 = vmul.f32 %v731, 10.0
        %v860 = vmul.f32 %v732, 10.0
        %v861 = vmul.f32 %v733, 10.0
        %v862 = vsub.f32 %v634, %v858
        %v863 = vsub.f32 %v641, %v859
        %v864 = vsub.f32 %v648, %v860
        %v865 = vsub.f32 %v655, %v861
        %v866 = vrot.slane %v862, 4
        %v867 = vmax.f32 %v862, %v866
        %v868 = vrot.slane %v867, 2
        %v869 = vmax.f32 %v867, %v868
        %v870 = vrot.slane %v869, 1
        %v871 = vmax.f32 %v869, %v870
        %v872 = vrot.slane %v863, 4
        %v873 = vmax.f32 %v863, %v872
        %v874 = vrot.slane %v873, 2
        %v875 = vmax.f32 %v873, %v874
        %v876 = vrot.slane %v875, 1
        %v877 = vmax.f32 %v875, %v876
        %v878 = vrot.slane %v864, 4
        %v879 = vmax.f32 %v864, %v878
        %v880 = vrot.slane %v879, 2
        %v881 = vmax.f32 %v879, %v880
        %v882 = vrot.slane %v881, 1
        %v883 = vmax.f32 %v881, %v882
        %v884 = vrot.slane %v865, 4
        %v885 = vmax.f32 %v865, %v884
        %v886 = vrot.slane %v885, 2
        %v887 = vmax.f32 %v885, %v886
        %v888 = vrot.slane %v887, 1
        %v889 = vmax.f32 %v887, %v888
        %v890 = vsub.f32 %v862, %v871
        %v891 = vsub.f32 %v863, %v877
        %v892 = vsub.f32 %v864, %v883
        %v893 = vsub.f32 %v865, %v889
        %v894 = vmul.f32 %v890, 1.442695
        %v895 = vpow.pop %v894
        %v896 = vmul.f32 %v891, 1.442695
        %v897 = vpow.pop %v896
        %v898 = vmul.f32 %v892, 1.442695
        %v899 = vpow.pop %v898
        %v900 = vmul.f32 %v893, 1.442695
        %v901 = vpow.pop %v900
        %v902 = vmul.f32 %v895, %v603
        %v903 = vmul.f32 %v897, %v610
        %v904 = vmul.f32 %v899, %v617
        %v905 = vmul.f32 %v901, %v624
        %v906 = vrot.slane %v902, 4
        %v907 = vadd.f32 %v902, %v906
        %v908 = vrot.slane %v907, 2
        %v909 = vadd.f32 %v907, %v908
        %v910 = vrot.slane %v909, 1
        %v911 = vadd.f32 %v909, %v910
        %v912 = vrot.slane %v903, 4
        %v913 = vadd.f32 %v903, %v912
        %v914 = vrot.slane %v913, 2
        %v915 = vadd.f32 %v913, %v914
        %v916 = vrot.slane %v915, 1
        %v917 = vadd.f32 %v915, %v916
        %v918 = vrot.slane %v904, 4
        %v919 = vadd.f32 %v904, %v918
        %v920 = vrot.slane %v919, 2
        %v921 = vadd.f32 %v919, %v920
        %v922 = vrot.slane %v921, 1
        %v923 = vadd.f32 %v921, %v922
        %v924 = vrot.slane %v905, 4
        %v925 = vadd.f32 %v905, %v924
        %v926 = vrot.slane %v925, 2
        %v927 = vadd.f32 %v925, %v926
        %v928 = vrot.slane %v927, 1
        %v929 = vadd.f32 %v927, %v928
        %v930 = vrot.slane %v895, 4
        %v931 = vadd.f32 %v895, %v930
        %v932 = vrot.slane %v931, 2
        %v933 = vadd.f32 %v931, %v932
        %v934 = vrot.slane %v933, 1
        %v935 = vadd.f32 %v933, %v934
        %v936 = vrot.slane %v897, 4
        %v937 = vadd.f32 %v897, %v936
        %v938 = vrot.slane %v937, 2
        %v939 = vadd.f32 %v937, %v938
        %v940 = vrot.slane %v939, 1
        %v941 = vadd.f32 %v939, %v940
        %v942 = vrot.slane %v899, 4
        %v943 = vadd.f32 %v899, %v942
        %v944 = vrot.slane %v943, 2
        %v945 = vadd.f32 %v943, %v944
        %v946 = vrot.slane %v945, 1
        %v947 = vadd.f32 %v945, %v946
        %v948 = vrot.slane %v901, 4
        %v949 = vadd.f32 %v901, %v948
        %v950 = vrot.slane %v949, 2
        %v951 = vadd.f32 %v949, %v950
        %v952 = vrot.slane %v951, 1
        %v953 = vadd.f32 %v951, %v952
        %v954 = vrcp.pop %v935
        %v955 = vrcp.pop %v941
        %v956 = vrcp.pop %v947
        %v957 = vrcp.pop %v953
        %v958 = vmul.f32 %v911, %v954
        %v959 = vmul.f32 %v917, %v955
        %v960 = vmul.f32 %v923, %v956
        %v961 = vmul.f32 %v929, %v957
        %v962 = vmax.f32 %v842, %v843
        %v963 = vmax.f32 %v844, %v845
        %v964 = vmax.f32 %v962, %v963
        %v965 = vsub.f32 %v743, %v964
        %v966 = vsub.f32 %v749, %v964
        %v967 = vsub.f32 %v755, %v964
        %v968 = vsub.f32 %v761, %v964
        %v969 = vmul.f32 %v965, 1.442695
        %v970 = vpow.pop %v969
        %v971 = vmul.f32 %v966, 1.442695
        %v972 = vpow.pop %v971
        %v973 = vmul.f32 %v967, 1.442695
        %v974 = vpow.pop %v973
        %v975 = vmul.f32 %v968, 1.442695
        %v976 = vpow.pop %v975
        %v977 = vmul.f32 %v779, %v970
        %v978 = vmul.f32 %v785, %v972
        %v979 = vmul.f32 %v791, %v974
        %v980 = vmul.f32 %v797, %v976
        %v985 = vrot.slane %v978, 7
        %vm986 = vcmask 1041409
        %v987 = vsel %vm986, %v985, %v977
        %v988 = vrot.slane %v979, 6
        %vm989 = vcmask 1042434
        %v990 = vsel %vm989, %v988, %v987
        %v991 = vrot.slane %v980, 5
        %vm992 = vcmask 1043459
        %v993 = vsel %vm992, %v991, %v990
        %vm995 = vcmask 1043456
        %v996 = vsel %vm995, %v993, 0.0
        %v997 = vrot.slane %v996, 4
        %v998 = vadd.f32 %v996, %v997
        %v999 = vrot.slane %v998, 2
        %v1000 = vadd.f32 %v998, %v999
        %v1001 = vrot.slane %v1000, 1
        %v1002 = vadd.f32 %v1000, %v1001
        %v1003 = vrcp.pop %v1002
        %v1004 = vlaneseq
        %v1005 = vshrl.u32 %v1004, 7
        %v1006 = vsub.s32 0, %v1005
        %v1007 = vrot.slane %v1003, %v1006
        %v1008 = vmul.f32 %v977, %v1007
        %v1009 = vmul.f32 %v978, %v1007
        %v1010 = vmul.f32 %v979, %v1007
        %v1011 = vmul.f32 %v980, %v1007
        %v1012 = vlaneseq
        %v1013 = vand.u32 %v1012, 127
        %vm1014 = vcmp.lt.s32.totalorder %v1013, 9
        %v1015 = vsel %vm1014, 1, 0
        %vm1016 = vcmp.eq.s32.totalorder %v1015, 1
        %v1021 = vsel %vm986, %v831, %v830
        %v1022 = vsel %vm989, %v832, %v1021
        %v1023 = vsel %vm992, %v833, %v1022
        %v1025 = vsel %vm1016, %v1023, 0.0
        %v1026 = vsel %vm995, %v1025, 0.0
        %1027 = vadd.xlane.f32.xlu0 %v1026
        %v1028 = vpop.xlane.xlu0 %1027
        %v1029 = vmul.f32 %v1028, 0.11111111
        %v1030 = vld [vmem:[%s7] sm:$0xf]
        %v1032 = vrot.slane %v1029, 1
        %v1033 = vrot.slane %v1029, 2
        %v1034 = vrot.slane %v1029, 3
        %v1039 = vsub.f32 %v830, %v1029
        %v1040 = vsub.f32 %v831, %v1032
        %v1041 = vsub.f32 %v832, %v1033
        %v1042 = vsub.f32 %v833, %v1034
        %v1043 = vmul.f32 %v1008, %v1039
        %v1044 = vmul.f32 %v1009, %v1040
        %v1045 = vmul.f32 %v1010, %v1041
        %v1046 = vmul.f32 %v1011, %v1042
        %v1051 = vrot.slane %v1044, 7
        %v1052 = vsel %vm986, %v1051, %v1043
        %v1053 = vrot.slane %v1045, 6
        %v1054 = vsel %vm989, %v1053, %v1052
        %v1055 = vrot.slane %v1046, 5
        %v1056 = vsel %vm992, %v1055, %v1054
        %vm1057 = vcmask 31744
        %v1059 = vsel %vm1057, %v1030, 0
        %v1061 = vsel %vm995, %v1056, 0
        %1063 = vmatprep.subr.mxu0 0.0
        %1064 = vmatpush1.msra.mxu0 %v1061
        %1065 = vmatprep.subr.mxu0 0.0
        %1066 = vmatpush1.msra.mxu0 0.0
        %1067 = vmatprep.subr.mxu0 0.0
        %1068 = vmatpush1.msra.mxu0 0.0
        %1069 = vmatprep.subr.mxu0 0.0
        %1070 = vmatpush1.msra.mxu0 0.0
        %1071 = vmatprep.subr.mxu0 0.0
        %1072 = vmatpush1.msra.mxu0 0.0
        %1073 = vmatprep.subr.mxu0 0.0
        %1074 = vmatpush1.msra.mxu0 0.0
        %1075 = vmatprep.subr.mxu0 0.0
        %1076 = vmatpush1.msra.mxu0 0.0
        %1077 = vmatprep.subr.mxu0 0.0
        %1078 = vmatpush1.msra.mxu0 0.0
        %1079 = vmatprep.subr.mxu0 0.0
        %1080 = vmatpush1.msra.mxu0 0.0
        %1081 = vmatprep.subr.mxu0 0.0
        %1082 = vmatpush1.msra.mxu0 0.0
        %1083 = vmatprep.subr.mxu0 0.0
        %1084 = vmatpush1.msra.mxu0 0.0
        %1085 = vmatprep.subr.mxu0 0.0
        %1086 = vmatpush1.msra.mxu0 0.0
        %1087 = vmatprep.subr.mxu0 0.0
        %1088 = vmatpush1.msra.mxu0 0.0
        %1089 = vmatprep.subr.mxu0 0.0
        %1090 = vmatpush1.msra.mxu0 0.0
        %1091 = vmatprep.subr.mxu0 0.0
        %1092 = vmatpush1.msra.mxu0 0.0
        %1093 = vmatprep.subr.mxu0 0.0
        %1094 = vmatpush1.msra.mxu0 0.0
        %1095 = vmatprep.subr.mxu0 0.0
        %1096 = vmatpush1.msra.mxu0 0.0
        %1097 = vmatprep.subr.mxu0 0.0
        %1098 = vmatpush1.msra.mxu0 0.0
        %1099 = vmatprep.subr.mxu0 0.0
        %1100 = vmatpush1.msra.mxu0 0.0
        %1101 = vmatprep.subr.mxu0 0.0
        %1102 = vmatpush1.msra.mxu0 0.0
        %1103 = vmatprep.subr.mxu0 0.0
        %1104 = vmatpush1.msra.mxu0 0.0
        %1105 = vmatprep.subr.mxu0 0.0
        %1106 = vmatpush1.msra.mxu0 0.0
        %1107 = vmatprep.subr.mxu0 0.0
        %1108 = vmatpush1.msra.mxu0 0.0
        %1109 = vmatprep.subr.mxu0 0.0
        %1110 = vmatpush1.msra.mxu0 0.0
        %1111 = vmatprep.subr.mxu0 0.0
        %1112 = vmatpush1.msra.mxu0 0.0
        %1113 = vmatprep.subr.mxu0 0.0
        %1114 = vmatpush1.msra.mxu0 0.0
        %1115 = vmatprep.subr.mxu0 0.0
        %1116 = vmatpush1.msra.mxu0 0.0
        %1117 = vmatprep.subr.mxu0 0.0
        %1118 = vmatpush1.msra.mxu0 0.0
        %1119 = vmatprep.subr.mxu0 0.0
        %1120 = vmatpush1.msra.mxu0 0.0
        %1121 = vmatprep.subr.mxu0 0.0
        %1122 = vmatpush1.msra.mxu0 0.0
        %1123 = vmatprep.subr.mxu0 0.0
        %1124 = vmatpush1.msra.mxu0 0.0
        %1125 = vmatprep.subr.mxu0 0.0
        %1126 = vmatpush1.msra.mxu0 0.0
        %1127 = vmatprep.mubr.f32.mxu0 0.0
        %1128 = vmatmul.mubr.f32.gmra.mrb[0].mxu0 %v1059
        %v1129 = vpop.f32.mrb[0].mxu0
        %v1130 = vadd.f32 %v1029, %v1129
        %v1131 = vpop.f32.mrb[0].mxu0
        %1132 = vdwg.mxu0
        %v1134 = vrot.slane %v1130, 1
        %v1135 = vrot.slane %v1130, 2
        %v1136 = vrot.slane %v1130, 3
        %v1141 = vsub.f32 %v958, %v1130
        %v1142 = vsub.f32 %v959, %v1134
        %v1143 = vsub.f32 %v960, %v1135
        %v1144 = vsub.f32 %v961, %v1136
        %vm1149 = vcmask 1045509
        %v1150 = vsel %vm1149, %v855, %v854
        %vm1151 = vcmask 1046534
        %v1152 = vsel %vm1151, %v856, %v1150
        %vm1153 = vcmask 1047559
        %v1154 = vsel %vm1153, %v857, %v1152
        %v1160 = vrot.slane %v1142, 7
        %v1161 = vsel %vm986, %v1160, %v1141
        %v1162 = vrot.slane %v1143, 6
        %v1163 = vsel %vm989, %v1162, %v1161
        %v1164 = vrot.slane %v1144, 5
        %v1165 = vsel %vm992, %v1164, %v1163
        %v1167 = vsel %vm995, %v1130, %v1154
        %1168 = vxpose.xlu0.b32.start [1/16] %v1167, 128
        %1169 = vxpose.xlu0.b32.cont [2/16] %v1165, 128
        %1170 = vxpose.xlu0.b32.cont [3/16] 0.0, 128
        %1171 = vxpose.xlu0.b32.cont [4/16] 0.0, 128
        %1172 = vxpose.xlu0.b32.cont [5/16] 0.0, 128
        %1173 = vxpose.xlu0.b32.cont [6/16] 0.0, 128
        %1174 = vxpose.xlu0.b32.cont [7/16] 0.0, 128
        %1175 = vxpose.xlu0.b32.cont [8/16] 0.0, 128
        %1176 = vxpose.xlu0.b32.cont [9/16] 0.0, 128
        %1177 = vxpose.xlu0.b32.cont [10/16] 0.0, 128
        %1178 = vxpose.xlu0.b32.cont [11/16] 0.0, 128
        %1179 = vxpose.xlu0.b32.cont [12/16] 0.0, 128
        %1180 = vxpose.xlu0.b32.cont [13/16] 0.0, 128
        %1181 = vxpose.xlu0.b32.cont [14/16] 0.0, 128
        %1182 = vxpose.xlu0.b32.cont [15/16] 0.0, 128
        %1183 = vxpose.xlu0.b32.end [16/16] 0.0, 128
        %v1184 = vpop.trf.xlu0
        %v1185 = vpop.trf.xlu0
        %v1186 = vpop.trf.xlu0
        %v1187 = vpop.trf.xlu0
        %v1188 = vpop.trf.xlu0
        %v1189 = vpop.trf.xlu0
        %v1190 = vpop.trf.xlu0
        %v1191 = vpop.trf.xlu0
        %v1192 = vpop.trf.xlu0
        %v1193 = vpop.trf.xlu0
        %v1194 = vpop.trf.xlu0
        %v1195 = vpop.trf.xlu0
        %v1196 = vpop.trf.xlu0
        %v1197 = vpop.trf.xlu0
        %v1198 = vpop.trf.xlu0
        %v1199 = vpop.trf.xlu0
        %v1200 = vld [vmem:[%s8] sm:$0xff]
        %v1201 = vld [vmem:[%s8 + $0x8] sm:$0xf]
        %v1202 = vld [vmem:[%s9] sm:$0x1]
        %v1204 = vlaneseq
        %v1205 = vshrl.u32 %v1204, 7
        %v1206 = vsub.s32 0, %v1205
        %v1207 = vrot.slane %v1202, %v1206
        %vm1209 = vcmask 97280
        %v1211 = vsel %vm1209, %v1184, 0
        %v1214 = vsel %vm1209, %v1185, 0
        %v1217 = vsel %vm1209, %v1186, 0
        %v1220 = vsel %vm1209, %v1187, 0
        %v1223 = vsel %vm1209, %v1188, 0
        %v1226 = vsel %vm1209, %v1189, 0
        %v1229 = vsel %vm1209, %v1190, 0
        %v1232 = vsel %vm1209, %v1191, 0
        %v1235 = vsel %vm1209, %v1192, 0
        %v1238 = vsel %vm1209, %v1193, 0
        %v1241 = vsel %vm1209, %v1194, 0
        %v1244 = vsel %vm1209, %v1195, 0
        %v1247 = vsel %vm1209, %v1196, 0
        %v1250 = vsel %vm1209, %v1197, 0
        %v1253 = vsel %vm1209, %v1198, 0
        %v1256 = vsel %vm1209, %v1199, 0
        %v1259 = vsel %vm995, %v1201, 0
        %1261 = vmatprep.subr.mxu0 0.0
        %1262 = vmatpush1.msra.mxu0 %v1200
        %1263 = vmatprep.subr.mxu0 0.0
        %1264 = vmatpush1.msra.mxu0 %v1259
        %1265 = vmatprep.subr.mxu0 0.0
        %1266 = vmatpush1.msra.mxu0 0.0
        %1267 = vmatprep.subr.mxu0 0.0
        %1268 = vmatpush1.msra.mxu0 0.0
        %1269 = vmatprep.subr.mxu0 0.0
        %1270 = vmatpush1.msra.mxu0 0.0
        %1271 = vmatprep.subr.mxu0 0.0
        %1272 = vmatpush1.msra.mxu0 0.0
        %1273 = vmatprep.subr.mxu0 0.0
        %1274 = vmatpush1.msra.mxu0 0.0
        %1275 = vmatprep.subr.mxu0 0.0
        %1276 = vmatpush1.msra.mxu0 0.0
        %1277 = vmatprep.subr.mxu0 0.0
        %1278 = vmatpush1.msra.mxu0 0.0
        %1279 = vmatprep.subr.mxu0 0.0
        %1280 = vmatpush1.msra.mxu0 0.0
        %1281 = vmatprep.subr.mxu0 0.0
        %1282 = vmatpush1.msra.mxu0 0.0
        %1283 = vmatprep.subr.mxu0 0.0
        %1284 = vmatpush1.msra.mxu0 0.0
        %1285 = vmatprep.subr.mxu0 0.0
        %1286 = vmatpush1.msra.mxu0 0.0
        %1287 = vmatprep.subr.mxu0 0.0
        %1288 = vmatpush1.msra.mxu0 0.0
        %1289 = vmatprep.subr.mxu0 0.0
        %1290 = vmatpush1.msra.mxu0 0.0
        %1291 = vmatprep.subr.mxu0 0.0
        %1292 = vmatpush1.msra.mxu0 0.0
        %1293 = vmatprep.subr.mxu0 0.0
        %1294 = vmatpush1.msra.mxu0 0.0
        %1295 = vmatprep.subr.mxu0 0.0
        %1296 = vmatpush1.msra.mxu0 0.0
        %1297 = vmatprep.subr.mxu0 0.0
        %1298 = vmatpush1.msra.mxu0 0.0
        %1299 = vmatprep.subr.mxu0 0.0
        %1300 = vmatpush1.msra.mxu0 0.0
        %1301 = vmatprep.subr.mxu0 0.0
        %1302 = vmatpush1.msra.mxu0 0.0
        %1303 = vmatprep.subr.mxu0 0.0
        %1304 = vmatpush1.msra.mxu0 0.0
        %1305 = vmatprep.subr.mxu0 0.0
        %1306 = vmatpush1.msra.mxu0 0.0
        %1307 = vmatprep.subr.mxu0 0.0
        %1308 = vmatpush1.msra.mxu0 0.0
        %1309 = vmatprep.subr.mxu0 0.0
        %1310 = vmatpush1.msra.mxu0 0.0
        %1311 = vmatprep.subr.mxu0 0.0
        %1312 = vmatpush1.msra.mxu0 0.0
        %1313 = vmatprep.subr.mxu0 0.0
        %1314 = vmatpush1.msra.mxu0 0.0
        %1315 = vmatprep.subr.mxu0 0.0
        %1316 = vmatpush1.msra.mxu0 0.0
        %1317 = vmatprep.subr.mxu0 0.0
        %1318 = vmatpush1.msra.mxu0 0.0
        %1319 = vmatprep.subr.mxu0 0.0
        %1320 = vmatpush1.msra.mxu0 0.0
        %1321 = vmatprep.subr.mxu0 0.0
        %1322 = vmatpush1.msra.mxu0 0.0
        %1323 = vmatprep.subr.mxu0 0.0
        %1324 = vmatpush1.msra.mxu0 0.0
        %1325 = vmatprep.mubr.f32.mxu0 0.0
        %1326 = vmatmul.mubr.f32.gmra.mrb[0].mxu0 %v1211
        %v1327 = vpop.f32.mrb[0].mxu0
        %v1328 = vadd.f32 %v1207, %v1327
        %v1329 = vpop.f32.mrb[0].mxu0
        %1330 = vmatprep.mubr.f32.mxu0 0.0
        %1331 = vmatmul.mubr.f32.gmra.mrb[0].mxu0 %v1214
        %v1332 = vpop.f32.mrb[0].mxu0
        %v1333 = vadd.f32 %v1207, %v1332
        %v1334 = vpop.f32.mrb[0].mxu0
        %1335 = vmatprep.mubr.f32.mxu0 0.0
        %1336 = vmatmul.mubr.f32.gmra.mrb[0].mxu0 %v1217
        %v1337 = vpop.f32.mrb[0].mxu0
        %v1338 = vadd.f32 %v1207, %v1337
        %v1339 = vpop.f32.mrb[0].mxu0
        %1340 = vmatprep.mubr.f32.mxu0 0.0
        %1341 = vmatmul.mubr.f32.gmra.mrb[0].mxu0 %v1220
        %v1342 = vpop.f32.mrb[0].mxu0
        %v1343 = vadd.f32 %v1207, %v1342
        %v1344 = vpop.f32.mrb[0].mxu0
        %1345 = vmatprep.mubr.f32.mxu0 0.0
        %1346 = vmatmul.mubr.f32.gmra.mrb[0].mxu0 %v1223
        %v1347 = vpop.f32.mrb[0].mxu0
        %v1348 = vadd.f32 %v1207, %v1347
        %v1349 = vpop.f32.mrb[0].mxu0
        %1350 = vmatprep.mubr.f32.mxu0 0.0
        %1351 = vmatmul.mubr.f32.gmra.mrb[0].mxu0 %v1226
        %v1352 = vpop.f32.mrb[0].mxu0
        %v1353 = vadd.f32 %v1207, %v1352
        %v1354 = vpop.f32.mrb[0].mxu0
        %1355 = vmatprep.mubr.f32.mxu0 0.0
        %1356 = vmatmul.mubr.f32.gmra.mrb[0].mxu0 %v1229
        %v1357 = vpop.f32.mrb[0].mxu0
        %v1358 = vadd.f32 %v1207, %v1357
        %v1359 = vpop.f32.mrb[0].mxu0
        %1360 = vmatprep.mubr.f32.mxu0 0.0
        %1361 = vmatmul.mubr.f32.gmra.mrb[0].mxu0 %v1232
        %v1362 = vpop.f32.mrb[0].mxu0
        %v1363 = vadd.f32 %v1207, %v1362
        %v1364 = vpop.f32.mrb[0].mxu0
        %1365 = vmatprep.mubr.f32.mxu0 0.0
        %1366 = vmatmul.mubr.f32.gmra.mrb[0].mxu0 %v1235
        %v1367 = vpop.f32.mrb[0].mxu0
        %v1368 = vadd.f32 %v1207, %v1367
        %v1369 = vpop.f32.mrb[0].mxu0
        %1370 = vmatprep.mubr.f32.mxu0 0.0
        %1371 = vmatmul.mubr.f32.gmra.mrb[0].mxu0 %v1238
        %v1372 = vpop.f32.mrb[0].mxu0
        %v1373 = vadd.f32 %v1207, %v1372
        %v1374 = vpop.f32.mrb[0].mxu0
        %1375 = vmatprep.mubr.f32.mxu0 0.0
        %1376 = vmatmul.mubr.f32.gmra.mrb[0].mxu0 %v1241
        %v1377 = vpop.f32.mrb[0].mxu0
        %v1378 = vadd.f32 %v1207, %v1377
        %v1379 = vpop.f32.mrb[0].mxu0
        %1380 = vmatprep.mubr.f32.mxu0 0.0
        %1381 = vmatmul.mubr.f32.gmra.mrb[0].mxu0 %v1244
        %v1382 = vpop.f32.mrb[0].mxu0
        %v1383 = vadd.f32 %v1207, %v1382
        %v1384 = vpop.f32.mrb[0].mxu0
        %1385 = vmatprep.mubr.f32.mxu0 0.0
        %1386 = vmatmul.mubr.f32.gmra.mrb[0].mxu0 %v1247
        %v1387 = vpop.f32.mrb[0].mxu0
        %v1388 = vadd.f32 %v1207, %v1387
        %v1389 = vpop.f32.mrb[0].mxu0
        %1390 = vmatprep.mubr.f32.mxu0 0.0
        %1391 = vmatmul.mubr.f32.gmra.mrb[0].mxu0 %v1250
        %v1392 = vpop.f32.mrb[0].mxu0
        %v1393 = vadd.f32 %v1207, %v1392
        %v1394 = vpop.f32.mrb[0].mxu0
        %1395 = vmatprep.mubr.f32.mxu0 0.0
        %1396 = vmatmul.mubr.f32.gmra.mrb[0].mxu0 %v1253
        %v1397 = vpop.f32.mrb[0].mxu0
        %v1398 = vadd.f32 %v1207, %v1397
        %v1399 = vpop.f32.mrb[0].mxu0
        %1400 = vmatprep.mubr.f32.mxu0 0.0
        %1401 = vmatmul.mubr.f32.gmra.mrb[0].mxu0 %v1256
        %v1402 = vpop.f32.mrb[0].mxu0
        %v1403 = vadd.f32 %v1207, %v1402
        %v1404 = vpop.f32.mrb[0].mxu0
        %1405 = vdwg.mxu0
        %1406 = vst [vmem:[%s555] sm:$0xff] %v1328
        %1407 = vst [vmem:[%s555 + $0x8] sm:$0xff] %v1333
        %1408 = vst [vmem:[%s555 + $0x10] sm:$0xff] %v1338
        %1409 = vst [vmem:[%s555 + $0x18] sm:$0xff] %v1343
        %1410 = vst [vmem:[%s555 + $0x20] sm:$0xff] %v1348
        %1411 = vst [vmem:[%s555 + $0x28] sm:$0xff] %v1353
        %1412 = vst [vmem:[%s555 + $0x30] sm:$0xff] %v1358
        %1413 = vst [vmem:[%s555 + $0x38] sm:$0xff] %v1363
        %1414 = vst [vmem:[%s555 + $0x40] sm:$0xff] %v1368
        %1415 = vst [vmem:[%s555 + $0x48] sm:$0xff] %v1373
        %1416 = vst [vmem:[%s555 + $0x50] sm:$0xff] %v1378
        %1417 = vst [vmem:[%s555 + $0x58] sm:$0xff] %v1383
        %1418 = vst [vmem:[%s555 + $0x60] sm:$0xff] %v1388
        %1419 = vst [vmem:[%s555 + $0x68] sm:$0xff] %v1393
        %1420 = vst [vmem:[%s555 + $0x70] sm:$0xff] %v1398
        %1421 = vst [vmem:[%s555 + $0x78] sm:$0xff] %v1403
        %v1422 = vld [vmem:[%s487] sm:$0xf]
        %v1423 = vadd.f32 %v1422, 1e-09
        %v1424 = vlog2.pop %v1423
        %v1425 = vmul.f32 %v1424, 0.6931472
        %v1426 = vlaneseq
        %v1427 = vshrl.u32 %v1426, 7
        %v1428 = vsub.s32 0, %v1427
        %v1429 = vrot.slane %v1425, %v1428
        %1431 = vbcast.lane.b32.xlu0 %v1429, 256
        %v1432 = vpop.permute.xlu0 %1431
        %v1433 = vlaneseq
        %v1434 = vshrl.u32 %v1433, 7
        %v1435 = vsub.s32 1, %v1434
        %v1436 = vrot.slane %v1425, %v1435
        %1438 = vbcast.lane.b32.xlu0 %v1436, 256
        %v1439 = vpop.permute.xlu0 %1438
        %v1440 = vlaneseq
        %v1441 = vshrl.u32 %v1440, 7
        %v1442 = vsub.s32 2, %v1441
        %v1443 = vrot.slane %v1425, %v1442
        %1445 = vbcast.lane.b32.xlu0 %v1443, 256
        %v1446 = vpop.permute.xlu0 %1445
        %v1447 = vlaneseq
        %v1448 = vshrl.u32 %v1447, 7
        %v1449 = vsub.s32 3, %v1448
        %v1450 = vrot.slane %v1425, %v1449
        %1452 = vbcast.lane.b32.xlu0 %v1450, 256
        %v1453 = vpop.permute.xlu0 %1452
        %v1456 = vunpack.c.l.s4 1966171168
        %v1457 = vunpack.c.0.s8 %v1456
        %v1458 = vlaneseq
        %v1459 = vshrl.u32 %v1458, 7
        %v1460 = vsub.s32 %v1457, %v1459
        %v1461 = vrot.slane %v569, %v1460
        %v1462 = vcombine.high %v1461, %v1461
        %v1464 = vunpack.c.l.s4 1966171168
        %v1465 = vunpack.c.0.s8 %v1464
        %v1466 = vlaneseq
        %v1467 = vshrl.u32 %v1466, 7
        %v1468 = vsub.s32 %v1465, %v1467
        %v1469 = vrot.slane %v1461, %v1468
        %v1471 = vunpack.c.l.s4 1966171168
        %v1472 = vunpack.c.0.s8 %v1471
        %v1473 = vlaneseq
        %v1474 = vshrl.u32 %v1473, 7
        %v1475 = vsub.s32 %v1472, %v1474
        %v1476 = vrot.slane %v1462, %v1475
        %v1477 = vcombine.high %v1469, %v1469
        %v1478 = vcombine.high %v1476, %v1476
        %v1479 = vlaneseq
        %v1480 = vshrl.u32 %v1479, 7
        %v1481 = vsub.s32 0, %v1480
        %v1482 = vrot.slane %v1469, %v1481
        %v1483 = vlaneseq
        %v1484 = vshrl.u32 %v1483, 7
        %v1485 = vsub.s32 0, %v1484
        %v1486 = vrot.slane %v1476, %v1485
        %v1487 = vlaneseq
        %v1488 = vshrl.u32 %v1487, 7
        %v1489 = vsub.s32 0, %v1488
        %v1490 = vrot.slane %v1477, %v1489
        %v1491 = vlaneseq
        %v1492 = vshrl.u32 %v1491, 7
        %v1493 = vsub.s32 0, %v1492
        %v1494 = vrot.slane %v1478, %v1493
        %v1499 = vsub.f32 %v662, %v1482
        %v1500 = vsub.f32 %v669, %v1486
        %v1501 = vsub.f32 %v676, %v1490
        %v1502 = vsub.f32 %v683, %v1494
        %v1503 = vmul.f32 %v1499, %v1499
        %v1504 = vmul.f32 %v1500, %v1500
        %v1505 = vmul.f32 %v1501, %v1501
        %v1506 = vmul.f32 %v1502, %v1502
        %v1507 = vmul.f32 %v716, %v1503
        %v1508 = vmul.f32 %v720, %v1504
        %v1509 = vmul.f32 %v724, %v1505
        %v1510 = vmul.f32 %v728, %v1506
        %v1511 = vsub.f32 %v1432, %v1507
        %v1512 = vsub.f32 %v1439, %v1508
        %v1513 = vsub.f32 %v1446, %v1509
        %v1514 = vsub.f32 %v1453, %v1510
        %vm1515 = vcmask 64512
        %v1516 = vsel %vm1515, %v1511, -inf
        %v1517 = vrot.slane %v1516, 4
        %v1518 = vmax.f32 %v1516, %v1517
        %v1519 = vrot.slane %v1518, 2
        %v1520 = vmax.f32 %v1518, %v1519
        %v1521 = vrot.slane %v1520, 1
        %v1522 = vmax.f32 %v1520, %v1521
        %v1523 = vsel %vm1515, %v1512, -inf
        %v1524 = vrot.slane %v1523, 4
        %v1525 = vmax.f32 %v1523, %v1524
        %v1526 = vrot.slane %v1525, 2
        %v1527 = vmax.f32 %v1525, %v1526
        %v1528 = vrot.slane %v1527, 1
        %v1529 = vmax.f32 %v1527, %v1528
        %v1530 = vsel %vm1515, %v1513, -inf
        %v1531 = vrot.slane %v1530, 4
        %v1532 = vmax.f32 %v1530, %v1531
        %v1533 = vrot.slane %v1532, 2
        %v1534 = vmax.f32 %v1532, %v1533
        %v1535 = vrot.slane %v1534, 1
        %v1536 = vmax.f32 %v1534, %v1535
        %v1537 = vsel %vm1515, %v1514, -inf
        %v1538 = vrot.slane %v1537, 4
        %v1539 = vmax.f32 %v1537, %v1538
        %v1540 = vrot.slane %v1539, 2
        %v1541 = vmax.f32 %v1539, %v1540
        %v1542 = vrot.slane %v1541, 1
        %v1543 = vmax.f32 %v1541, %v1542
        %v1544 = vsub.f32 %v1511, %v1522
        %v1545 = vsub.f32 %v1512, %v1529
        %v1546 = vsub.f32 %v1513, %v1536
        %v1547 = vsub.f32 %v1514, %v1543
        %v1548 = vmul.f32 %v1544, 1.442695
        %v1549 = vpow.pop %v1548
        %v1550 = vmul.f32 %v1545, 1.442695
        %v1551 = vpow.pop %v1550
        %v1552 = vmul.f32 %v1546, 1.442695
        %v1553 = vpow.pop %v1552
        %v1554 = vmul.f32 %v1547, 1.442695
        %v1555 = vpow.pop %v1554
        %v1556 = vsel %vm1515, %v1549, 0.0
        %v1557 = vrot.slane %v1556, 4
        %v1558 = vadd.f32 %v1556, %v1557
        %v1559 = vrot.slane %v1558, 2
        %v1560 = vadd.f32 %v1558, %v1559
        %v1561 = vrot.slane %v1560, 1
        %v1562 = vadd.f32 %v1560, %v1561
        %v1563 = vsel %vm1515, %v1551, 0.0
        %v1564 = vrot.slane %v1563, 4
        %v1565 = vadd.f32 %v1563, %v1564
        %v1566 = vrot.slane %v1565, 2
        %v1567 = vadd.f32 %v1565, %v1566
        %v1568 = vrot.slane %v1567, 1
        %v1569 = vadd.f32 %v1567, %v1568
        %v1570 = vsel %vm1515, %v1553, 0.0
        %v1571 = vrot.slane %v1570, 4
        %v1572 = vadd.f32 %v1570, %v1571
        %v1573 = vrot.slane %v1572, 2
        %v1574 = vadd.f32 %v1572, %v1573
        %v1575 = vrot.slane %v1574, 1
        %v1576 = vadd.f32 %v1574, %v1575
        %v1577 = vsel %vm1515, %v1555, 0.0
        %v1578 = vrot.slane %v1577, 4
        %v1579 = vadd.f32 %v1577, %v1578
        %v1580 = vrot.slane %v1579, 2
        %v1581 = vadd.f32 %v1579, %v1580
        %v1582 = vrot.slane %v1581, 1
        %v1583 = vadd.f32 %v1581, %v1582
        %v1584 = vmul.f32 %v1549, %v603
        %v1585 = vmul.f32 %v1551, %v610
        %v1586 = vmul.f32 %v1553, %v617
        %v1587 = vmul.f32 %v1555, %v624
        %v1588 = vsel %vm1515, %v1584, 0.0
        %v1589 = vrot.slane %v1588, 4
        %v1590 = vadd.f32 %v1588, %v1589
        %v1591 = vrot.slane %v1590, 2
        %v1592 = vadd.f32 %v1590, %v1591
        %v1593 = vrot.slane %v1592, 1
        %v1594 = vadd.f32 %v1592, %v1593
        %v1595 = vsel %vm1515, %v1585, 0.0
        %v1596 = vrot.slane %v1595, 4
        %v1597 = vadd.f32 %v1595, %v1596
        %v1598 = vrot.slane %v1597, 2
        %v1599 = vadd.f32 %v1597, %v1598
        %v1600 = vrot.slane %v1599, 1
        %v1601 = vadd.f32 %v1599, %v1600
        %v1602 = vsel %vm1515, %v1586, 0.0
        %v1603 = vrot.slane %v1602, 4
        %v1604 = vadd.f32 %v1602, %v1603
        %v1605 = vrot.slane %v1604, 2
        %v1606 = vadd.f32 %v1604, %v1605
        %v1607 = vrot.slane %v1606, 1
        %v1608 = vadd.f32 %v1606, %v1607
        %v1609 = vsel %vm1515, %v1587, 0.0
        %v1610 = vrot.slane %v1609, 4
        %v1611 = vadd.f32 %v1609, %v1610
        %v1612 = vrot.slane %v1611, 2
        %v1613 = vadd.f32 %v1611, %v1612
        %v1614 = vrot.slane %v1613, 1
        %v1615 = vadd.f32 %v1613, %v1614
        %v1616 = vrcp.pop %v1562
        %v1617 = vrcp.pop %v1569
        %v1618 = vrcp.pop %v1576
        %v1619 = vrcp.pop %v1583
        %v1620 = vmul.f32 %v1594, %v1616
        %v1621 = vmul.f32 %v1601, %v1617
        %v1622 = vmul.f32 %v1608, %v1618
        %v1623 = vmul.f32 %v1615, %v1619
        %v1624 = vlog2.pop %v1562
        %v1625 = vmul.f32 %v1624, 0.6931472
        %v1626 = vlog2.pop %v1569
        %v1627 = vmul.f32 %v1626, 0.6931472
        %v1628 = vlog2.pop %v1576
        %v1629 = vmul.f32 %v1628, 0.6931472
        %v1630 = vlog2.pop %v1583
        %v1631 = vmul.f32 %v1630, 0.6931472
        %v1632 = vadd.f32 %v1625, %v1522
        %v1633 = vadd.f32 %v1627, %v1529
        %v1634 = vadd.f32 %v1629, %v1536
        %v1635 = vadd.f32 %v1631, %v1543
        %v1636 = vsel %vm1515, %v1632, -inf
        %v1637 = vsel %vm1515, %v1633, -inf
        %v1638 = vsel %vm1515, %v1634, -inf
        %v1639 = vsel %vm1515, %v1635, -inf
        %v1640 = vmax.f32 %v1636, %v1637
        %v1641 = vmax.f32 %v1638, %v1639
        %v1642 = vmax.f32 %v1640, %v1641
        %v1643 = vsub.f32 %v1522, %v1642
        %v1644 = vsub.f32 %v1529, %v1642
        %v1645 = vsub.f32 %v1536, %v1642
        %v1646 = vsub.f32 %v1543, %v1642
        %v1647 = vmul.f32 %v1643, 1.442695
        %v1648 = vpow.pop %v1647
        %v1649 = vmul.f32 %v1644, 1.442695
        %v1650 = vpow.pop %v1649
        %v1651 = vmul.f32 %v1645, 1.442695
        %v1652 = vpow.pop %v1651
        %v1653 = vmul.f32 %v1646, 1.442695
        %v1654 = vpow.pop %v1653
        %v1655 = vmul.f32 %v1562, %v1648
        %v1656 = vmul.f32 %v1569, %v1650
        %v1657 = vmul.f32 %v1576, %v1652
        %v1658 = vmul.f32 %v1583, %v1654
        %v1663 = vrot.slane %v1656, 7
        %v1664 = vsel %vm986, %v1663, %v1655
        %v1665 = vrot.slane %v1657, 6
        %v1666 = vsel %vm989, %v1665, %v1664
        %v1667 = vrot.slane %v1658, 5
        %v1668 = vsel %vm992, %v1667, %v1666
        %vm1670 = vcmask 60416
        %v1671 = vsel %vm1670, %v1668, 0.0
        %v1672 = vrot.slane %v1671, 4
        %v1673 = vadd.f32 %v1671, %v1672
        %v1674 = vrot.slane %v1673, 2
        %v1675 = vadd.f32 %v1673, %v1674
        %v1676 = vrot.slane %v1675, 1
        %v1677 = vadd.f32 %v1675, %v1676
        %v1678 = vrcp.pop %v1677
        %v1679 = vlaneseq
        %v1680 = vshrl.u32 %v1679, 7
        %v1681 = vsub.s32 0, %v1680
        %v1682 = vrot.slane %v1678, %v1681
        %v1683 = vmul.f32 %v1655, %v1682
        %v1684 = vmul.f32 %v1656, %v1682
        %v1685 = vmul.f32 %v1657, %v1682
        %v1686 = vmul.f32 %v1658, %v1682
        %v1691 = vsel %vm986, %v1621, %v1620
        %v1692 = vsel %vm989, %v1622, %v1691
        %v1693 = vsel %vm992, %v1623, %v1692
        %v1695 = vsel %vm1670, %v1693, 0.0
        %1696 = vadd.xlane.f32.xlu0 %v1695
        %v1697 = vpop.xlane.xlu0 %1696
        %v1698 = vrcp.pop 8.0
        %v1699 = vmul.f32 %v1697, %v1698
        %v1700 = vld [vmem:[%s7] sm:$0xf]
        %v1702 = vrot.slane %v1699, 1
        %v1703 = vrot.slane %v1699, 2
        %v1704 = vrot.slane %v1699, 3
        %v1709 = vsub.f32 %v1620, %v1699
        %v1710 = vsub.f32 %v1621, %v1702
        %v1711 = vsub.f32 %v1622, %v1703
        %v1712 = vsub.f32 %v1623, %v1704
        %v1713 = vmul.f32 %v1683, %v1709
        %v1714 = vmul.f32 %v1684, %v1710
        %v1715 = vmul.f32 %v1685, %v1711
        %v1716 = vmul.f32 %v1686, %v1712
        %v1721 = vrot.slane %v1714, 7
        %v1722 = vsel %vm986, %v1721, %v1713
        %v1723 = vrot.slane %v1715, 6
        %v1724 = vsel %vm989, %v1723, %v1722
        %v1725 = vrot.slane %v1716, 5
        %v1726 = vsel %vm992, %v1725, %v1724
        %v1728 = vsel %vm1057, %v1700, 0
        %v1730 = vsel %vm995, %v1726, 0
        %1732 = vmatprep.subr.mxu0 0.0
        %1733 = vmatpush1.msra.mxu0 %v1730
        %1734 = vmatprep.subr.mxu0 0.0
        %1735 = vmatpush1.msra.mxu0 0.0
        %1736 = vmatprep.subr.mxu0 0.0
        %1737 = vmatpush1.msra.mxu0 0.0
        %1738 = vmatprep.subr.mxu0 0.0
        %1739 = vmatpush1.msra.mxu0 0.0
        %1740 = vmatprep.subr.mxu0 0.0
        %1741 = vmatpush1.msra.mxu0 0.0
        %1742 = vmatprep.subr.mxu0 0.0
        %1743 = vmatpush1.msra.mxu0 0.0
        %1744 = vmatprep.subr.mxu0 0.0
        %1745 = vmatpush1.msra.mxu0 0.0
        %1746 = vmatprep.subr.mxu0 0.0
        %1747 = vmatpush1.msra.mxu0 0.0
        %1748 = vmatprep.subr.mxu0 0.0
        %1749 = vmatpush1.msra.mxu0 0.0
        %1750 = vmatprep.subr.mxu0 0.0
        %1751 = vmatpush1.msra.mxu0 0.0
        %1752 = vmatprep.subr.mxu0 0.0
        %1753 = vmatpush1.msra.mxu0 0.0
        %1754 = vmatprep.subr.mxu0 0.0
        %1755 = vmatpush1.msra.mxu0 0.0
        %1756 = vmatprep.subr.mxu0 0.0
        %1757 = vmatpush1.msra.mxu0 0.0
        %1758 = vmatprep.subr.mxu0 0.0
        %1759 = vmatpush1.msra.mxu0 0.0
        %1760 = vmatprep.subr.mxu0 0.0
        %1761 = vmatpush1.msra.mxu0 0.0
        %1762 = vmatprep.subr.mxu0 0.0
        %1763 = vmatpush1.msra.mxu0 0.0
        %1764 = vmatprep.subr.mxu0 0.0
        %1765 = vmatpush1.msra.mxu0 0.0
        %1766 = vmatprep.subr.mxu0 0.0
        %1767 = vmatpush1.msra.mxu0 0.0
        %1768 = vmatprep.subr.mxu0 0.0
        %1769 = vmatpush1.msra.mxu0 0.0
        %1770 = vmatprep.subr.mxu0 0.0
        %1771 = vmatpush1.msra.mxu0 0.0
        %1772 = vmatprep.subr.mxu0 0.0
        %1773 = vmatpush1.msra.mxu0 0.0
        %1774 = vmatprep.subr.mxu0 0.0
        %1775 = vmatpush1.msra.mxu0 0.0
        %1776 = vmatprep.subr.mxu0 0.0
        %1777 = vmatpush1.msra.mxu0 0.0
        %1778 = vmatprep.subr.mxu0 0.0
        %1779 = vmatpush1.msra.mxu0 0.0
        %1780 = vmatprep.subr.mxu0 0.0
        %1781 = vmatpush1.msra.mxu0 0.0
        %1782 = vmatprep.subr.mxu0 0.0
        %1783 = vmatpush1.msra.mxu0 0.0
        %1784 = vmatprep.subr.mxu0 0.0
        %1785 = vmatpush1.msra.mxu0 0.0
        %1786 = vmatprep.subr.mxu0 0.0
        %1787 = vmatpush1.msra.mxu0 0.0
        %1788 = vmatprep.subr.mxu0 0.0
        %1789 = vmatpush1.msra.mxu0 0.0
        %1790 = vmatprep.subr.mxu0 0.0
        %1791 = vmatpush1.msra.mxu0 0.0
        %1792 = vmatprep.subr.mxu0 0.0
        %1793 = vmatpush1.msra.mxu0 0.0
        %1794 = vmatprep.subr.mxu0 0.0
        %1795 = vmatpush1.msra.mxu0 0.0
        %1796 = vmatprep.mubr.f32.mxu0 0.0
        %1797 = vmatmul.mubr.f32.gmra.mrb[0].mxu0 %v1728
        %v1798 = vpop.f32.mrb[0].mxu0
        %v1799 = vadd.f32 %v1699, %v1798
        %v1800 = vpop.f32.mrb[0].mxu0
        %1801 = vdwg.mxu0
        %v1802 = vld [vmem:[%s496] sm:$0xf]
        %v1803 = vsub.f32 %v567, %v1799
        %v1804 = vmul.f32 %v1803, %v1803
        %v1805 = vmul.f32 %v1802, %v1804
        %v1806 = vsel %vm1670, %v1805, 0.0
        %1807 = vadd.xlane.f32.xlu0 %v1806
        %v1808 = vpop.xlane.xlu0 %1807
        %v1809 = vrot.slane %v1808, 4
        %v1810 = vadd.f32 %v1808, %v1809
        %v1811 = vrot.slane %v1810, 2
        %v1812 = vadd.f32 %v1810, %v1811
        %v1813 = vrot.slane %v1812, 1
        %v1814 = vadd.f32 %v1812, %v1813
        %s1815 = vtos %v1814
        %v1816 = vstv %s1815
        %v1817 = vsel %vm1670, %v1802, 0.0
        %1818 = vadd.xlane.f32.xlu0 %v1817
        %v1819 = vpop.xlane.xlu0 %1818
        %v1820 = vrot.slane %v1819, 4
        %v1821 = vadd.f32 %v1819, %v1820
        %v1822 = vrot.slane %v1821, 2
        %v1823 = vadd.f32 %v1821, %v1822
        %v1824 = vrot.slane %v1823, 1
        %v1825 = vadd.f32 %v1823, %v1824
        %s1826 = vtos %v1825
        %v1827 = vstv %s1826
        %v1828 = vadd.f32 %v1827, 1e-09
        %v1829 = vrcp.pop %v1828
        %v1830 = vmul.f32 %v1816, %v1829
        %vm1831 = vcmask 0
        %1832 = vst.msk [vmem:[%s566] sm:$0x1] %vm1831, %v1830
        %s1833 = sand.u32 %s283, 1
        %s1834 = scalar_lea.sflag [#allocation4], %s1833
        %s1835 = sand.u32 %s283, 1
        %s1836 = smul.addr %s1835, 128
        %s1837 = scalar_lea.vmem [#allocation11], %s1836
        %p1838 = scmp.lt.s32.totalorder %s35, 7
        %s1839 = scalar_select %p1838, %s35, 7
        %s1840 = scalar_lea.vmem %s11, %s1839
        // Predicated region
        $region81: #{tpu_custom_call.1} parent=59 // pred_check
          %p1841 = pneg %p293
        $region82: #{tpu_custom_call.1} parent=59 // pred_check_branch
          %1843 = sbr.rel (%p1841) target = $region84
        $region83: #{tpu_custom_call.1} parent=59 // pred_region
          %s1845 = ssub.s32 2048, 2048
          %1846 = vsyncadd %s1834, %s1845
          %s1847 = smul.addr %s35, 16
          %s1848 = smul.addr %s1847, 128
          %s1849 = scalar_lea.hbm %s10, %s1848
          %s1850 = sshll.u32 %s1837, 4
          %s1851 = int_to_ptr.vmem [resolvable:$true] %s1850
          %1856 = dma.vmem_to_hbm [thread:$0]  %s1851, 2048, %s1849, %s1834, 128, 128, 8
        $region84: #{tpu_custom_call.1} parent=59 // pred_fallthru
          _
        // Predicated region
        $region85: #{tpu_custom_call.1} parent=59 // pred_check
          %p1857 = pneg %p319
        $region86: #{tpu_custom_call.1} parent=59 // pred_check_branch
          %1859 = sbr.rel (%p1857) target = $region88
        $region87: #{tpu_custom_call.1} parent=59 // pred_region
          _
        $region88: #{tpu_custom_call.1} parent=59 // pred_fallthru
          _
      $region60: #{tpu_custom_call.1} parent=5 // pred_fallthru
        _
      %p1860 = scmp.le.s32.totalorder 2, %s30
      // Predicated region
      $region89: #{tpu_custom_call.1} parent=5 // pred_check
        %p1861 = pneg %p1860
      $region90: #{tpu_custom_call.1} parent=5 // pred_check_branch
        %1863 = sbr.rel (%p1861) target = $region92
      $region91: #{tpu_custom_call.1} parent=5 // pred_region
        %s1864 = ssub.s32 %s30, 2
        // Predicated region
        $region93: #{tpu_custom_call.1} parent=91 // pred_check
          %p1865 = pneg %p299
        $region94: #{tpu_custom_call.1} parent=91 // pred_check_branch
          %1867 = sbr.rel (%p1865) target = $region96
        $region95: #{tpu_custom_call.1} parent=91 // pred_region
          %s1868 = sand.u32 %s284, 1
          %s1869 = scalar_lea.sflag [#allocation4], %s1868
          %s1870 = sand.u32 %s284, 1
          %s1871 = smul.addr %s1870, 128
          %s1872 = scalar_lea.vmem [#allocation11], %s1871
          %1873 = dma.done %s1869, 2048
        $region96: #{tpu_custom_call.1} parent=91 // pred_fallthru
          _
        // Predicated region
        $region97: #{tpu_custom_call.1} parent=91 // pred_check
          %p1874 = pneg %p325
        $region98: #{tpu_custom_call.1} parent=91 // pred_check_branch
          %1876 = sbr.rel (%p1874) target = $region100
        $region99: #{tpu_custom_call.1} parent=91 // pred_region
          %p1877 = scmp.lt.s32.totalorder %s36, 7
          %s1878 = scalar_select %p1877, %s36, 7
          %s1879 = scalar_lea.vmem %s11, %s1878
        $region100: #{tpu_custom_call.1} parent=91 // pred_fallthru
          _
      $region92: #{tpu_custom_call.1} parent=5 // pred_fallthru
        _
    $region6: #{tpu_custom_call.1} parent=1 // loop_footer
      %s34 = sadd.s32 1, %s30
    $region7: #{tpu_custom_call.1} parent=1 // loop_footer_branch
      %29 = sbr.rel target = $region3
    $region8: #{tpu_custom_call.1} parent=1 // loop_exit
      _
    %1880 = vsyncpa [#allocation3], 1
    %s1881 = scalar_lea.sflag [#allocation3], 1
    %1882 = vsyncpa %s1881, 1
    %1883 = vsyncpa [#allocation6], 1
    %s1884 = scalar_lea.sflag [#allocation6], 1
    %1885 = vsyncpa %s1884, 1
    %1886 = vsyncpa [#allocation9], 1
    %s1887 = scalar_lea.sflag [#allocation9], 1
    %1888 = vsyncpa %s1887, 1
    %1889 = vsyncpa [#allocation4], 1
    %s1890 = scalar_lea.sflag [#allocation4], 1
    %1891 = vsyncpa %s1890, 1

</llo_original>
